<compile_context>
chip_gen: v7x
topology: tpu7x:2x2x1
jax: 0.10.0
libtpu: 0.0.40
codegen_flags: <defaults>
</compile_context>

<pallas_src>
import functools
import math

import jax
import jax.numpy as jnp
from jax.experimental import pallas as pl
from jax.experimental.pallas import tpu as pltpu

# ----------------------------- configuration --------------------------------
CFG = dict(
    input_dim=4, feature_channels=32, split=2, num_scales=1,
    upsample_factor=4, attn_type='swin', attn_splits_list=[1],
    corr_radius_list=[-1], prop_radius_list=[-1], num_head=1,
    ffn_dim_expansion=4, num_transformer_layers=1, num_refine=1,
    tasks=['flow'],
)
C = CFG['feature_channels']
INTERVAL = CFG['input_dim'] // CFG['split']
UF = CFG['upsample_factor']
FFN_EXP = CFG['ffn_dim_expansion']

relu = jax.nn.relu


def _round_up(x, m):
    return ((x + m - 1) // m) * m


PC = _round_up(C, 128)          # padded feature-channel width carried in HBM


def _default_vmem_limit():
    """Scoped-VMEM limit with headroom, derived from the actual chip."""
    try:
        cap = int(pltpu.get_tpu_info().vmem_capacity_bytes)
    except Exception:
        cap = 64 * 1024 * 1024                     # v7x-safe fallback
    lim = cap - 16 * 1024 * 1024
    return int(min(max(lim, 32 * 1024 * 1024), 96 * 1024 * 1024))


VMEM_LIMIT_BYTES = _default_vmem_limit()


def _pick_row_tile(m, cap=512):
    """Row (second-minor) tile.  No artificial halving at small M (single-TC
    v5e/v6e); split only above `cap` rows (which also feeds both v7x cores)."""
    if m <= 8 or m % 8 != 0:
        return m
    if m <= cap:
        return m
    return cap


def _pick_k_tile(k, cap=4096):
    """Single K tile whenever it fits (every layer of this model); otherwise a
    divisor <= 2048 for the accumulating kernel."""
    if k <= cap:
        return k, 1
    for cand in (2048, 1024, 512, 256, 128):
        if k % cand == 0:
            return cand, k // cand
    return k, 1


def _pick_seq_tile(l, cap=128):
    """Sequence tile (flash attention): must divide L and be a multiple of 8."""
    if l <= cap:
        return l
    t = cap - (cap % 8)
    while t >= 8:
        if l % t == 0:
            return t
        t -= 8
    return l


def _apply_act(y, act):
    if act == 'relu':
        return jnp.maximum(y, 0.0)
    if act == 'sigmoid':
        return jax.nn.sigmoid(y)
    if act == 'tanh':
        return jnp.tanh(y)
    if act == 'gelu':
        return jax.nn.gelu(y)
    return y


# ====================== Pallas kernel 1: dense / conv matmul =================
def _dense1_kernel(x_ref, w_ref, b_ref, o_ref, *, act):
    """Single-K-tile path: dot + bias + activation straight into o_ref."""
    x = x_ref[...]
    if x.dtype != jnp.bfloat16:
        x = x.astype(jnp.bfloat16)
    y = jnp.dot(x, w_ref[...], preferred_element_type=jnp.float32) + b_ref[...]
    o_ref[...] = _apply_act(y, act).astype(o_ref.dtype)


def _dense1_ln_kernel(x_ref, w_ref, b_ref, g_ref, bb_ref, o_ref, *, n_real, eps):
    """Single-K-tile path with a fused LayerNorm epilogue.
    Pad lanes of y are exactly zero (pad weight cols / bias are zero), so
    sum / sum-of-squares over the full padded width divided by n_real give the
    real-channel mean/var without masking; pad lanes of g/beta are zero so the
    output pad lanes stay zero."""
    x = x_ref[...]
    if x.dtype != jnp.bfloat16:
        x = x.astype(jnp.bfloat16)
    y = jnp.dot(x, w_ref[...], preferred_element_type=jnp.float32) + b_ref[...]
    mu = jnp.sum(y, axis=-1, keepdims=True) / n_real
    var = jnp.sum(y * y, axis=-1, keepdims=True) / n_real - mu * mu
    yn = (y - mu) * jax.lax.rsqrt(var + eps)
    o_ref[...] = (yn * g_ref[...] + bb_ref[...]).astype(o_ref.dtype)


def _denseK_kernel(x_ref, w_ref, b_ref, o_ref, acc_ref, *, nk, act):
    """General accumulating path (only for K > 4096)."""
    kk = pl.program_id(2)

    @pl.when(kk == 0)
    def _init():
        acc_ref[...] = jnp.zeros_like(acc_ref)

    x = x_ref[...]
    if x.dtype != jnp.bfloat16:
        x = x.astype(jnp.bfloat16)
    acc_ref[...] += jnp.dot(x, w_ref[...], preferred_element_type=jnp.float32)

    @pl.when(kk == nk - 1)
    def _finalize():
        y = acc_ref[...] + b_ref[...]
        o_ref[...] = _apply_act(y, act).astype(o_ref.dtype)


def dense(x, p, act=None, out_dtype=jnp.bfloat16, ln=None):
    """x:[M,K] @ p['w']:[K,Np](bf16, zero pad cols) + bias (+ act / fused LN).
    Returns the FULL padded [M, Np] (no channel slice)."""
    w, b = p['w'], p['b']
    m, k = x.shape
    kw_, np_ = w.shape
    assert kw_ == k, (kw_, k)
    tm = _pick_row_tile(m)
    tn = np_ if np_ <= 512 else 256          # Np is always a multiple of 128
    tk, nk = _pick_k_tile(k)
    grid_m = pl.cdiv(m, tm)
    grid_n = np_ // tn

    if nk == 1:
        if ln is not None:
            assert tn == np_, "fused LN needs a single N tile"
            g, bb, n_real = ln
            kernel = functools.partial(_dense1_ln_kernel,
                                       n_real=float(n_real), eps=1e-5)
            extra_in = [g, bb]
            extra_specs = [pl.BlockSpec((1, tn), lambda i, j: (0, j)),
                           pl.BlockSpec((1, tn), lambda i, j: (0, j))]
        else:
            kernel = functools.partial(_dense1_kernel, act=act)
            extra_in, extra_specs = [], []
        return pl.pallas_call(
            kernel,
            out_shape=jax.ShapeDtypeStruct((m, np_), out_dtype),
            grid=(grid_m, grid_n),
            in_specs=[pl.BlockSpec((tm, k), lambda i, j: (i, 0)),
                      pl.BlockSpec((k, tn), lambda i, j: (0, j)),
                      pl.BlockSpec((1, tn), lambda i, j: (0, j))] + extra_specs,
            out_specs=pl.BlockSpec((tm, tn), lambda i, j: (i, j)),
            compiler_params=pltpu.CompilerParams(
                dimension_semantics=("parallel", "parallel"),
                vmem_limit_bytes=VMEM_LIMIT_BYTES),
        )(x, w, b, *extra_in)

    assert ln is None
    return pl.pallas_call(
        functools.partial(_denseK_kernel, nk=nk, act=act),
        out_shape=jax.ShapeDtypeStruct((m, np_), out_dtype),
        grid=(grid_m, grid_n, nk),
        in_specs=[pl.BlockSpec((tm, tk), lambda i, j, kk: (i, kk)),
                  pl.BlockSpec((tk, tn), lambda i, j, kk: (kk, j)),
                  pl.BlockSpec((1, tn), lambda i, j, kk: (0, j))],
        out_specs=pl.BlockSpec((tm, tn), lambda i, j, kk: (i, j)),
        scratch_shapes=[pltpu.VMEM((tm, tn), jnp.float32)],
        compiler_params=pltpu.CompilerParams(
            dimension_semantics=("parallel", "parallel", "arbitrary"),
            vmem_limit_bytes=VMEM_LIMIT_BYTES),
    )(x, w, b)


# ============ Pallas kernel 2: softmax-attention / expectation ===============
def _softmax_attn_kernel(q_ref, k_ref, v_ref, o_ref, *, scale, exact):
    """Single-pass softmax(q k^T * scale) @ v (whole key axis in one block):
    no online-softmax scratch, no rescale."""
    q = q_ref[0]
    k = k_ref[0]
    if q.dtype != jnp.bfloat16:
        q = q.astype(jnp.bfloat16)
    if k.dtype != jnp.bfloat16:
        k = k.astype(jnp.bfloat16)
    s = jax.lax.dot_general(q, k, (((1,), (1,)), ((), ())),
                            preferred_element_type=jnp.float32)
    m = jnp.max(s, axis=-1, keepdims=True)
    p = jnp.exp((s - m) * scale)             # softmax(scale*s), exact in f32
    l = jnp.sum(p, axis=-1, keepdims=True)
    v = v_ref[0]
    if exact:                                 # coordinate expectation: all f32
        pv = jnp.dot(p, v.astype(jnp.float32), preferred_element_type=jnp.float32)
        out = pv / l
    else:
        pv = jnp.dot(p.astype(jnp.bfloat16), v.astype(jnp.bfloat16),
                     preferred_element_type=jnp.float32)
        out = pv * pl.reciprocal(l, approx=True)
    o_ref[0] = out.astype(o_ref.dtype)


def _flash_kernel(q_ref, k_ref, v_ref, o_ref, m_sc, l_sc, acc_sc,
                  *, nkv, scale, exact):
    """Online-softmax path (only used when the key axis needs tiling)."""
    kv = pl.program_id(2)

    @pl.when(kv == 0)
    def _init():
        m_sc[...] = jnp.full_like(m_sc, -jnp.inf)
        l_sc[...] = jnp.zeros_like(l_sc)
        acc_sc[...] = jnp.zeros_like(acc_sc)

    q = q_ref[0]
    k = k_ref[0]
    if q.dtype != jnp.bfloat16:
        q = q.astype(jnp.bfloat16)
    if k.dtype != jnp.bfloat16:
        k = k.astype(jnp.bfloat16)
    s = jax.lax.dot_general(q, k, (((1,), (1,)), ((), ())),
                            preferred_element_type=jnp.float32) * scale
    m_prev = m_sc[...]
    m_new = jnp.maximum(m_prev, jnp.max(s, axis=-1, keepdims=True))
    alpha = jnp.exp(m_prev - m_new)
    p = jnp.exp(s - m_new)
    l_sc[...] = alpha * l_sc[...] + jnp.sum(p, axis=-1, keepdims=True)
    v = v_ref[0]
    if exact:
        pv = jnp.dot(p, v.astype(jnp.float32), preferred_element_type=jnp.float32)
    else:
        pv = jnp.dot(p.astype(jnp.bfloat16), v.astype(jnp.bfloat16),
                     preferred_element_type=jnp.float32)
    acc_sc[...] = alpha * acc_sc[...] + pv
    m_sc[...] = m_new

    @pl.when(kv == nkv - 1)
    def _finalize():
        if exact:
            o_ref[0] = (acc_sc[...] / l_sc[...]).astype(o_ref.dtype)
        else:
            o_ref[0] = (acc_sc[...] *
                        pl.reciprocal(l_sc[...], approx=True)).astype(o_ref.dtype)


def flash_attention(q, k, v, scale, exact=False, out_dtype=jnp.bfloat16):
    """softmax(q k^T * scale) @ v.  q/k/v (and the output) are lane-padded to a
    multiple of 128 with zero pad lanes, so stores stay lane-dense."""
    b, lq, d = q.shape
    lk, dv = v.shape[1], v.shape[2]
    tq = _pick_seq_tile(lq)
    tkv = _pick_seq_tile(lk)
    nq, nkv = lq // tq, lk // tkv
    if nkv == 1:
        return pl.pallas_call(
            functools.partial(_softmax_attn_kernel, scale=scale, exact=exact),
            out_shape=jax.ShapeDtypeStruct((b, lq, dv), out_dtype),
            grid=(b, nq),
            in_specs=[pl.BlockSpec((1, tq, d), lambda bi, qi: (bi, qi, 0)),
                      pl.BlockSpec((1, lk, d), lambda bi, qi: (bi, 0, 0)),
                      pl.BlockSpec((1, lk, dv), lambda bi, qi: (bi, 0, 0))],
            out_specs=pl.BlockSpec((1, tq, dv), lambda bi, qi: (bi, qi, 0)),
            compiler_params=pltpu.CompilerParams(
                dimension_semantics=("parallel", "parallel"),
                vmem_limit_bytes=VMEM_LIMIT_BYTES),
        )(q, k, v)
    return pl.pallas_call(
        functools.partial(_flash_kernel, nkv=nkv, scale=scale, exact=exact),
        out_shape=jax.ShapeDtypeStruct((b, lq, dv), out_dtype),
        grid=(b, nq, nkv),
        in_specs=[pl.BlockSpec((1, tq, d), lambda bi, qi, ki: (bi, qi, 0)),
                  pl.BlockSpec((1, tkv, d), lambda bi, qi, ki: (bi, ki, 0)),
                  pl.BlockSpec((1, tkv, dv), lambda bi, qi, ki: (bi, ki, 0))],
        out_specs=pl.BlockSpec((1, tq, dv), lambda bi, qi, ki: (bi, qi, 0)),
        scratch_shapes=[pltpu.VMEM((tq, 1), jnp.float32),
                        pltpu.VMEM((tq, 1), jnp.float32),
                        pltpu.VMEM((tq, dv), jnp.float32)],
        compiler_params=pltpu.CompilerParams(
            dimension_semantics=("parallel", "parallel", "arbitrary"),
            vmem_limit_bytes=VMEM_LIMIT_BYTES),
    )(q, k, v)


# ================= Pallas kernel 3: correlation volume (bmm) =================
def _corr_kernel(f0_ref, f1_ref, o_ref, *, scale):
    a = f0_ref[0]
    b = f1_ref[0]
    if a.dtype != jnp.bfloat16:
        a = a.astype(jnp.bfloat16)
    if b.dtype != jnp.bfloat16:
        b = b.astype(jnp.bfloat16)
    s = jax.lax.dot_general(a, b, (((1,), (1,)), ((), ())),
                            preferred_element_type=jnp.float32)
    o_ref[0] = s * scale                      # scale applied in f32


def corr_volume(f0f, f1f, c_real):
    """[B,L,Cp] x [B,L,Cp] -> [B,L,L] correlation / sqrt(C_real) (pad lanes are
    zero, so the padded contraction is exact)."""
    b, l, cp = f0f.shape
    tq = _pick_seq_tile(l)
    return pl.pallas_call(
        functools.partial(_corr_kernel, scale=1.0 / math.sqrt(c_real)),
        out_shape=jax.ShapeDtypeStruct((b, l, l), jnp.float32),
        grid=(b, l // tq),
        in_specs=[pl.BlockSpec((1, tq, cp), lambda bi, qi: (bi, qi, 0)),
                  pl.BlockSpec((1, l, cp), lambda bi, qi: (bi, 0, 0))],
        out_specs=pl.BlockSpec((1, tq, l), lambda bi, qi: (bi, qi, 0)),
        compiler_params=pltpu.CompilerParams(
            dimension_semantics=("parallel", "parallel"),
            vmem_limit_bytes=VMEM_LIMIT_BYTES),
    )(f0f, f1f)


# ============================ conv / linear glue =============================
def extract_patches(x, kh, kw, stride=1, padding=(0, 0)):
    """NHWC patches in [M, kh*kw*C] layout; inherits x dtype (bf16 chain keeps
    the patch buffer bf16).
    # TODO(synk): replace with halo'd-BlockSpec in-VMEM patch construction."""
    n, h, w, cin = x.shape
    ph, pw = padding
    xp = jnp.pad(x, ((0, 0), (ph, ph), (pw, pw), (0, 0)))
    ho = (h + 2 * ph - kh) // stride + 1
    wo = (w + 2 * pw - kw) // stride + 1
    cols = []
    for i in range(kh):
        for j in range(kw):
            cols.append(xp[:, i:i + stride * ho:stride, j:j + stride * wo:stride, :])
    patches = jnp.concatenate(cols, axis=-1)              # [N, Ho, Wo, kh*kw*C]
    return patches.reshape(n * ho * wo, kh * kw * cin), ho, wo


def conv2d(x, p, stride=1, padding=(0, 0), act=None, out_dtype=jnp.bfloat16, ln=None):
    """NHWC conv via patches + tiled Pallas matmul with fused bias/act/LN;
    output keeps the padded channel width p['np']."""
    kh, kw = p['k']
    n = x.shape[0]
    if kh == 1 and kw == 1 and stride == 1 and padding == (0, 0):
        ho, wo = x.shape[1], x.shape[2]
        xm = x.reshape(n * ho * wo, x.shape[3])
    else:
        xm, ho, wo = extract_patches(x, kh, kw, stride, padding)
    y = dense(xm, p, act=act, out_dtype=out_dtype, ln=ln)
    return y.reshape(n, ho, wo, p['np'])


def linear(x, p, act=None, out_dtype=jnp.bfloat16, ln=None):
    lead = x.shape[:-1]
    y = dense(x.reshape(-1, x.shape[-1]), p, act=act, out_dtype=out_dtype, ln=ln)
    return y.reshape(lead + (p['np'],))


# ============================ model components ===============================
def coords_grid_nhwc(b, h, w):
    ys, xs = jnp.meshgrid(jnp.arange(h, dtype=jnp.float32),
                          jnp.arange(w, dtype=jnp.float32), indexing='ij')
    coords = jnp.stack([xs, ys], axis=-1)                 # (x, y) channel order
    return jnp.broadcast_to(coords[None], (b, h, w, 2))


def pos_embed_sine_nhwc(b, c, h, w):
    # TODO(synk): PositionEmbeddingSine approximated (normalize=True, scale=2*pi).
    num_pos_feats = c // 2
    ones = jnp.ones((b, h, w), jnp.float32)
    y_embed = jnp.cumsum(ones, axis=1)
    x_embed = jnp.cumsum(ones, axis=2)
    eps = 1e-6
    scale = 2 * math.pi
    y_embed = y_embed / (y_embed[:, -1:, :] + eps) * scale
    x_embed = x_embed / (x_embed[:, :, -1:] + eps) * scale
    dim_t = jnp.arange(num_pos_feats, dtype=jnp.float32)
    dim_t = 10000.0 ** (2.0 * jnp.floor(dim_t / 2.0) / num_pos_feats)
    pos_x = x_embed[..., None] / dim_t
    pos_y = y_embed[..., None] / dim_t
    pos_x = jnp.stack([jnp.sin(pos_x[..., 0::2]), jnp.cos(pos_x[..., 1::2])],
                      axis=4).reshape(b, h, w, -1)
    pos_y = jnp.stack([jnp.sin(pos_y[..., 0::2]), jnp.cos(pos_y[..., 1::2])],
                      axis=4).reshape(b, h, w, -1)
    return jnp.concatenate([pos_y, pos_x], axis=3)


def backbone_fwd(p, x, nets, F_out):
    # TODO(synk): RNNEncoder source not provided; simplified conv-GRU encoder (4x downsample).
    f = conv2d(x, p['conv1'], stride=2, padding=(1, 1), act='relu')
    f = conv2d(f, p['conv2'], stride=2, padding=(1, 1), act='relu')
    net = jnp.zeros_like(f) if nets is None else nets[0]
    hx = jnp.concatenate([net, f], axis=-1)
    zr = conv2d(hx, p['gru_zr'], padding=(1, 1), act='sigmoid')   # fused z/r gates
    z, r = jnp.split(zr, 2, axis=-1)
    q = conv2d(jnp.concatenate([r * net, f], axis=-1), p['gru_q'],
               padding=(1, 1), act='tanh')
    net = (1.0 - z) * net + z * q
    features = None
    if F_out:
        features = [conv2d(net, p['out'], padding=(1, 1), act='relu')]
    return features, [net]


def fpn_fwd(p, nets):
    # TODO(synk): FPN source not provided; single-scale 3x3 conv refinement.
    return [conv2d(nets[0], p['fpn'], padding=(1, 1), act='relu')]


def extract_feature(params, event_0, event_1):
    event_concat = jnp.concatenate([event_0, event_1], axis=0)     # NHWC, bf16
    events = jnp.split(event_concat, CFG['split'], axis=-1)
    nets, features = None, None
    for i, sl in enumerate(events):
        features, nets = backbone_fwd(params['backbone'], sl, nets,
                                      F_out=(i == CFG['split'] - 1))
        if i != CFG['split'] - 1:
            nets = fpn_fwd(params['fpn'], nets)
    features = features[::-1]
    feature_0, feature_1 = [], []
    for f in features:
        c0, c1 = jnp.split(f, 2, axis=0)
        feature_0.append(c0)
        feature_1.append(c1)
    return feature_0, feature_1


def feature_add_position(f0, f1, attn_splits, channels):
    b, h, w, cp = f0.shape
    pos = pos_embed_sine_nhwc(b, channels, h, w)
    pos = jnp.pad(pos, ((0, 0), (0, 0), (0, 0), (0, cp - channels))).astype(f0.dtype)
    return f0 + pos, f1 + pos


def attn_layer(p, source, target, c_real):
    q = linear(source, p['q'])
    kv = linear(target, p['kv'])                 # fused k/v (each 128-padded)
    k, v = jnp.split(kv, 2, axis=-1)
    message = flash_attention(q, k, v, scale=1.0 / math.sqrt(c_real))
    message = linear(message, p['merge'],
                     ln=(p['norm1_g'], p['norm1_b'], c_real))       # fused LN
    # TODO(synk): mlp1 could split its weight into two K blocks to skip this concat.
    message = linear(jnp.concatenate([source, message], axis=-1),
                     p['mlp1'], act='gelu')
    message = linear(message, p['mlp2'],
                     ln=(p['norm2_g'], p['norm2_b'], c_real))       # fused LN
    return source + message


def transformer_fwd(p, feature0, feature1):
    # TODO(synk): FeatureTransformer (GMFlow) source not provided; self+cross attention w/ FFN.
    b, h, w, cp = feature0.shape
    f0 = feature0.reshape(b, h * w, cp)          # NHWC -> pure reshape
    f1 = feature1.reshape(b, h * w, cp)
    concat0 = jnp.concatenate([f0, f1], axis=0)
    concat1 = jnp.concatenate([f1, f0], axis=0)
    for layer in p['layers']:
        concat0 = attn_layer(layer['self'], concat0, concat0, C)
        concat0 = attn_layer(layer['cross'], concat0, concat1, C)
        a, bb_ = jnp.split(concat0, 2, axis=0)
        concat1 = jnp.concatenate([bb_, a], axis=0)
    f0, f1 = jnp.split(concat0, 2, axis=0)
    return f0.reshape(b, h, w, cp), f1.reshape(b, h, w, cp)


def global_correlation_softmax(f0, f1, c_real):
    b, h, w, cp = f0.shape
    l = h * w
    f0f = f0.reshape(b, l, cp)
    f1f = f1.reshape(b, l, cp)
    init_grid = coords_grid_nhwc(b, h, w)                        # [b, h, w, 2] f32
    grid_flat = init_grid.reshape(b, l, 2)
    grid_pad = jnp.pad(grid_flat, ((0, 0), (0, 0), (0, 128 - 2)))  # lane-dense v
    corresp = flash_attention(f0f, f1f, grid_pad, scale=1.0 / math.sqrt(c_real),
                              exact=True, out_dtype=jnp.float32)
    corresp = corresp[..., :2].reshape(b, h, w, 2)
    return corresp - init_grid


def bilinear_sampler(img, coords):
    """img [B,C,H,W], coords [B,ho,wo,2] pixel coords (x,y), zero padding."""
    b, cc, h, w = img.shape
    x, y = coords[..., 0], coords[..., 1]
    x0 = jnp.floor(x); y0 = jnp.floor(y)
    x1 = x0 + 1.0;     y1 = y0 + 1.0
    wx = x - x0;       wy = y - y0

    def gather(xi, yi):
        valid = (xi >= 0) & (xi <= w - 1) & (yi >= 0) & (yi <= h - 1)
        xi_c = jnp.clip(xi, 0, w - 1).astype(jnp.int32)
        yi_c = jnp.clip(yi, 0, h - 1).astype(jnp.int32)
        flat = img.reshape(b, cc, h * w)
        idx = (yi_c * w + xi_c).reshape(b, 1, -1)
        vals = jnp.take_along_axis(flat, idx, axis=2).reshape(b, cc, *xi.shape[1:])
        return vals * valid[:, None].astype(img.dtype)

    v00 = gather(x0, y0); v01 = gather(x1, y0)
    v10 = gather(x0, y1); v11 = gather(x1, y1)
    return (v00 * ((1 - wx) * (1 - wy))[:, None] + v01 * (wx * (1 - wy))[:, None] +
            v10 * ((1 - wx) * wy)[:, None] + v11 * (wx * wy)[:, None])


def make_corr_block(f0, f1, radius=4):
    # TODO(synk): CorrBlock source not provided; RAFT-style single-level volume + window lookup
    #             (the data-dependent bilinear gather stays in plain JAX).
    b, h, w, cp = f0.shape
    l = h * w
    corr = corr_volume(f0.reshape(b, l, cp), f1.reshape(b, l, cp), C)   # Pallas bmm
    corr_vol = corr.reshape(b * h * w, 1, h, w)

    def lookup(coords):
        r = radius
        co = coords.reshape(b * h * w, 1, 1, 2)
        d = jnp.arange(-r, r + 1, dtype=jnp.float32)
        dgy, dgx = jnp.meshgrid(d, d, indexing='ij')
        delta = jnp.stack([dgx, dgy], axis=-1)                     # (x, y)
        coords_lvl = co + delta[None]
        sampled = bilinear_sampler(corr_vol, coords_lvl)           # [b*h*w,1,2r+1,2r+1]
        return sampled.reshape(b, h, w, (2 * r + 1) ** 2)

    return lookup


def update_block(p, net, inp, corr, flow):
    # TODO(synk): BasicUpdateBlock source not provided; RAFT motion-encoder + SepConvGRU + flow head.
    cor = conv2d(corr, p['convc1'], act='relu')
    cor = conv2d(cor, p['convc2'], padding=(1, 1), act='relu')
    flo = conv2d(flow, p['convf1'], padding=(3, 3), act='relu')
    flo = conv2d(flo, p['convf2'], padding=(1, 1), act='relu')
    out = conv2d(jnp.concatenate([cor, flo], axis=-1), p['conv'],
                 padding=(1, 1), act='relu')
    flow_b = flow.astype(jnp.bfloat16)
    motion = jnp.concatenate([out, flow_b], axis=-1)
    x = jnp.concatenate([inp, motion], axis=-1)

    def gru(net_h, x_h, zr_p, q_p, pad):
        hx = jnp.concatenate([net_h, x_h], axis=-1)
        zr = conv2d(hx, zr_p, padding=pad, act='sigmoid')   # fused z/r gates
        z, r = jnp.split(zr, 2, axis=-1)
        q = conv2d(jnp.concatenate([r * net_h, x_h], axis=-1), q_p,
                   padding=pad, act='tanh')
        return (1.0 - z) * net_h + z * q

    net = gru(net, x, p['conv_zr1'], p['conv_q1'], (0, 2))
    net = gru(net, x, p['conv_zr2'], p['conv_q2'], (2, 0))
    d = conv2d(net, p['fh1'], padding=(1, 1), act='relu')
    delta = conv2d(d, p['fh2'], padding=(1, 1), out_dtype=jnp.float32)
    return net, delta[..., :2]                                   # flow residual f32


def upsample_flow_with_mask(flow, mask, upsample_factor):
    n, h, w, ch = flow.shape
    uf = upsample_factor
    m = mask.reshape(n, h, w, 9, uf, uf)
    m = jax.nn.softmax(m, axis=3)
    pflat, _, _ = extract_patches(flow * uf, 3, 3, 1, (1, 1))    # F.unfold equivalent
    patches = pflat.reshape(n, h, w, 9, ch)
    up = jnp.einsum('nhwkuv,nhwkc->nhuwvc', m, patches)
    return up.reshape(n, h * uf, w * uf, ch)


# ============================== forward pass =================================
def event_match_forward(params, event_0, event_1, task='flow'):
    # inputs are NCHW (PyTorch convention); internal layout is NHWC bf16 with a
    # 128-lane-padded channel dim for all intermediate features.
    e0 = jnp.transpose(event_0, (0, 2, 3, 1)).astype(jnp.bfloat16)
    e1 = jnp.transpose(event_1, (0, 2, 3, 1)).astype(jnp.bfloat16)
    feature_0_list, feature_1_list = extract_feature(params, e0, e1)
    flow_preds = []
    flow = None

    # single scale (num_scales = 1), eval mode, task == 'flow'
    scale_idx = 0
    upsample_factor = CFG['upsample_factor'] * 2 ** (CFG['num_scales'] - 1 - scale_idx)
    feature_0, feature_1 = feature_0_list[scale_idx], feature_1_list[scale_idx]

    feature_0, feature_1 = feature_add_position(feature_0, feature_1,
                                                CFG['attn_splits_list'][scale_idx], C)
    feature_0, feature_1 = transformer_fwd(params['transformer'], feature_0, feature_1)

    flow_pred = global_correlation_softmax(feature_0, feature_1, C)   # corr_radius == -1
    flow = flow_pred if flow is None else flow + flow_pred            # f32

    # upsample mask (eval path, last scale, task == 'flow')
    concat = jnp.concatenate([flow.astype(jnp.bfloat16), feature_0], axis=-1)
    hcat = conv2d(concat, params['ups1'], padding=(1, 1), act='relu')
    mask = conv2d(hcat, params['ups2'], out_dtype=jnp.float32)[..., :UF * UF * 9]

    corr_fn = make_corr_block(feature_0, feature_1, radius=4)
    b, hgt, wid, _ = feature_0.shape
    coords0 = coords_grid_nhwc(b, hgt, wid)
    coords1 = coords0 + flow

    proj = conv2d(feature_0, params['proj'])
    net, inp = jnp.split(proj, 2, axis=-1)
    net = jnp.tanh(net)
    inp = relu(inp)

    for refine_idx in range(CFG['num_refine']):
        correlation = corr_fn(coords1)
        net, residual_flow = update_block(params['update'], net, inp, correlation, flow)
        flow = flow + residual_flow
        coords1 = coords1 + residual_flow
        if refine_idx == CFG['num_refine'] - 1:
            flow_up = upsample_flow_with_mask(flow, mask, upsample_factor)
            flow_preds.append(jnp.transpose(flow_up, (0, 3, 1, 2)))   # back to NCHW

    return {'flow_preds': flow_preds}


# ============================== parameter init ===============================
class ParamGen:
    def __init__(self, seed=42):
        self.key = jax.random.PRNGKey(seed)

    def take(self, shape, scale=0.05):
        self.key, sub = jax.random.split(self.key)
        return scale * jax.random.normal(sub, shape, dtype=jnp.float32)


def make_dense_param(g, c_in, out_segs, kernel=(1, 1)):
    """Weights stored pre-transposed, bf16, with each output segment padded to
    a 128-lane-dense width.  Pad columns and bias are zero, so every padded
    activation lane is exactly act(0) and downstream K pad rows contribute 0."""
    kh, kw = kernel
    K = c_in * kh * kw
    np_ = sum(p for _, p in out_segs)
    w = jnp.zeros((K, np_), jnp.float32)
    col = 0
    for real, pad in out_segs:
        w = w.at[:, col:col + real].set(g.take((K, real)))
        col += pad
    b = jnp.zeros((1, np_), jnp.float32)
    return {'w': w.astype(jnp.bfloat16), 'b': b, 'k': kernel, 'np': np_}


def make_ln_param(c_real, c_pad):
    g = jnp.pad(jnp.ones((1, c_real), jnp.float32), ((0, 0), (0, c_pad - c_real)))
    b = jnp.zeros((1, c_pad), jnp.float32)
    return g, b


def init_params():
    g = ParamGen(42)
    p = {}
    p['backbone'] = {
        'conv1': make_dense_param(g, INTERVAL, [(C, PC)], (3, 3)),
        'conv2': make_dense_param(g, PC, [(C, PC)], (3, 3)),
        'gru_zr': make_dense_param(g, 2 * PC, [(C, PC), (C, PC)], (3, 3)),  # fused z/r
        'gru_q': make_dense_param(g, 2 * PC, [(C, PC)], (3, 3)),
        'out': make_dense_param(g, PC, [(C, PC)], (3, 3)),
    }
    p['fpn'] = {'fpn': make_dense_param(g, PC, [(C, PC)], (3, 3))}

    ffn = 2 * C * FFN_EXP                      # 256
    layers = []
    for _ in range(CFG['num_transformer_layers']):
        layer = {}
        for name in ('self', 'cross'):
            n1g, n1b = make_ln_param(C, PC)
            n2g, n2b = make_ln_param(C, PC)
            layer[name] = {
                'q': make_dense_param(g, PC, [(C, PC)]),
                'kv': make_dense_param(g, PC, [(C, PC), (C, PC)]),   # fused k/v
                'merge': make_dense_param(g, PC, [(C, PC)]),
                'norm1_g': n1g, 'norm1_b': n1b,
                'mlp1': make_dense_param(g, 2 * PC, [(ffn, _round_up(ffn, 128))]),
                'mlp2': make_dense_param(g, _round_up(ffn, 128), [(C, PC)]),
                'norm2_g': n2g, 'norm2_b': n2b,
            }
        layers.append(layer)
    p['transformer'] = {'layers': layers}

    p['ups1'] = make_dense_param(g, 2 + PC, [(256, 256)], (3, 3))
    p['ups2'] = make_dense_param(g, 256, [(UF * UF * 9, _round_up(UF * UF * 9, 128))])
    p['proj'] = make_dense_param(g, PC, [(256, 256)])

    motion_ch = 128 + 2                       # conv-out (padded 128) + flow(2)
    gru_in = 128 + 128 + motion_ch            # net + inp + motion
    p['update'] = {
        'convc1': make_dense_param(g, 81, [(256, 256)]),
        'convc2': make_dense_param(g, 256, [(192, 256)], (3, 3)),
        'convf1': make_dense_param(g, 2, [(128, 128)], (7, 7)),
        'convf2': make_dense_param(g, 128, [(64, 128)], (3, 3)),
        'conv': make_dense_param(g, 256 + 128, [(126, 128)], (3, 3)),
        'conv_zr1': make_dense_param(g, gru_in, [(128, 128), (128, 128)], (1, 5)),
        'conv_q1': make_dense_param(g, gru_in, [(128, 128)], (1, 5)),
        'conv_zr2': make_dense_param(g, gru_in, [(128, 128), (128, 128)], (5, 1)),
        'conv_q2': make_dense_param(g, gru_in, [(128, 128)], (5, 1)),
        'fh1': make_dense_param(g, 128, [(256, 256)], (3, 3)),
        'fh2': make_dense_param(g, 256, [(2, 128)], (3, 3)),
    }
    return p


# =================================== main ====================================
if __name__ == "__main__":
    key = jax.random.PRNGKey(0)
    k0, k1 = jax.random.split(key)
    B, H, W = 2, 32, 32
    event_0 = jax.random.normal(k0, (B, CFG['input_dim'], H, W), dtype=jnp.float32)
    event_1 = jax.random.normal(k1, (B, CFG['input_dim'], H, W), dtype=jnp.float32)

    params = init_params()
    results = event_match_forward(params, event_0, event_1, task='flow')
    flow_up = results['flow_preds'][-1]
    jax.block_until_ready(flow_up)
    assert flow_up.shape == (B, 2, H, W), flow_up.shape
    assert bool(jnp.all(jnp.isfinite(flow_up)))
    print("KERNEL_OK")
</pallas_src>

<mosaic_0001>
module attributes {stable_mosaic.version = 11 : i64} {
  func.func @_dense1_kernel(%arg0: i32, %arg1: i32, %arg2: memref<512x18xbf16, #tpu.memory_space<vmem>>, %arg3: memref<18x128xbf16, #tpu.memory_space<vmem>>, %arg4: memref<1x128xf32, #tpu.memory_space<vmem>>, %arg5: memref<512x128xbf16, #tpu.memory_space<vmem>>) attributes {dimension_semantics = [#tpu.dimension_semantics<parallel>, #tpu.dimension_semantics<parallel>], iteration_bounds = array<i64: 2, 1>, scalar_prefetch = 0 : i64, scratch_operands = 0 : i64, tpu.core_type = #tpu.core_type<tc>, window_params = [{transform_indices = @transform_0, window_bounds = array<i64: 512, 18>}, {transform_indices = @transform_1, window_bounds = array<i64: 18, 128>}, {transform_indices = @transform_2, window_bounds = array<i64: 1, 128>}, {transform_indices = @transform_3, window_bounds = array<i64: 512, 128>}]} {
    %c0 = arith.constant 0 : index
    %c0_0 = arith.constant 0 : index
    %0 = vector.load %arg2[%c0, %c0_0] : memref<512x18xbf16, #tpu.memory_space<vmem>>, vector<512x18xbf16>
    %c0_1 = arith.constant 0 : index
    %c0_2 = arith.constant 0 : index
    %1 = vector.load %arg3[%c0_1, %c0_2] : memref<18x128xbf16, #tpu.memory_space<vmem>>, vector<18x128xbf16>
    %cst = arith.constant dense<0.000000e+00> : vector<512x128xf32>
    %2 = tpu.matmul %0, %1, %cst {dimension_numbers = #tpu.dot_dimension_numbers<[1], [0], [0], [1], [0, 0, 1, 1], [], []>} : vector<512x18xbf16>, vector<18x128xbf16>, vector<512x128xf32> -> vector<512x128xf32>
    %c0_3 = arith.constant 0 : index
    %c0_4 = arith.constant 0 : index
    %3 = vector.load %arg4[%c0_3, %c0_4] : memref<1x128xf32, #tpu.memory_space<vmem>>, vector<1x128xf32>
    %4 = vector.broadcast %3 : vector<1x128xf32> to vector<512x128xf32>
    %5 = arith.addf %2, %4 : vector<512x128xf32>
    %cst_5 = arith.constant 0.000000e+00 : f32
    %6 = vector.broadcast %cst_5 : f32 to vector<512x128xf32>
    %7 = arith.maximumf %5, %6 : vector<512x128xf32>
    %8 = arith.truncf %7 : vector<512x128xf32> to vector<512x128xbf16>
    %c0_6 = arith.constant 0 : index
    %c0_7 = arith.constant 0 : index
    %9 = vector.load %arg5[%c0_6, %c0_7] : memref<512x128xbf16, #tpu.memory_space<vmem>>, vector<512x128xbf16>
    tpu.vector_store %arg5[%c0_6, %c0_7], %8 {strides = array<i32>} : memref<512x128xbf16, #tpu.memory_space<vmem>>, vector<512x128xbf16>,
    return
  }
  func.func @transform_0(%arg0: i32, %arg1: i32) -> (i32, i32) {
    %c0_i32 = arith.constant 0 : i32
    %c0_i32_0 = arith.constant 0 : i32
    return %arg0, %c0_i32 : i32, i32
  }
  func.func @transform_1(%arg0: i32, %arg1: i32) -> (i32, i32) {
    %c0_i32 = arith.constant 0 : i32
    %c0_i32_0 = arith.constant 0 : i32
    return %c0_i32, %arg1 : i32, i32
  }
  func.func @transform_2(%arg0: i32, %arg1: i32) -> (i32, i32) {
    %c0_i32 = arith.constant 0 : i32
    %c0_i32_0 = arith.constant 0 : i32
    return %c0_i32, %arg1 : i32, i32
  }
  func.func @transform_3(%arg0: i32, %arg1: i32) -> (i32, i32) {
    %c0_i32 = arith.constant 0 : i32
    return %arg0, %arg1 : i32, i32
  }
}

</mosaic_0001>

<llo_original>
// kernel: tpu_custom_call.1
$region0: #{tpu_custom_call.1}
  #allocation0 [shape = 'u32[]', space=smem, size = 0x4, offset = 0x4, fixed_abs, tag = 'smem constant byte address 0x4 - core index']
  #allocation1 [shape = 'u32[144,128]{1,0:T(1,128)}', space=vmem, size = 0x12000, scoped, tag = 'internal scratch']
  %s0 = inlined_call_operand.vmem [shape: bf16[1024,18], index: 0, kind: input, shape index: {}]
  %s1 = inlined_call_operand.vmem [shape: bf16[18,128], index: 1, kind: input, shape index: {}]
  %s2 = inlined_call_operand.vmem [shape: f32[1,128], index: 2, kind: input, shape index: {}]
  %s3 = inlined_call_operand.hbm [shape: bf16[1024,128], index: 3, kind: output, shape index: {}]
  %s4 = sld [smem:[#allocation0]]
  $region45: #{tpu_custom_call.1} parent=0
    _
  %s6 = ssub.s32 1, %s4
  %s7 = scalar_select 0, %s6, %s4
  $region1: #{tpu_custom_call.1} parent=0
    #allocation2 [shape = 'u8[262144]{0}', space=vmem, size = 0x40000, scoped, tag = 'output window, operand 0']
    #allocation3 [shape = 's32[2]{0}', space=sflag, size = 0x8, scoped, tag = 'scoped memory for tpu_custom_call.1']
    %8 = vsyncpa [#allocation3], 0
    %s9 = scalar_lea.sflag [#allocation3], 1
    %10 = vsyncpa %s9, 0
    loop: start=0, step=1, limit=4
    $region2: #{tpu_custom_call.1} parent=1 // loop_pre_header
      _
    $region3: #{tpu_custom_call.1} parent=1 // loop_header
      %s12 = sphi 0, %s16
      %p13 = scmp.ge.s32.totalorder %s12, 4
      %s19 = sphi 0, %s31
      %s20 = sphi 0, %s27
      %s21 = sphi 0, %s19
      %s22 = sphi 0, %s20
      %s23 = sphi 0, %s21
      %s24 = sphi 0, %s22
      %s34 = sphi 0, %s36
      %s37 = sphi 0, %s34
      %s38 = sphi 0, %s37
      %s54 = sphi 0, %s38
      %s60 = sphi 0, %s62
      %s63 = sphi 0, %s60
      %s64 = sphi 0, %s63
      %s80 = sphi 0, %s64
      %s86 = sphi 0, %s88
      %s89 = sphi 0, %s86
      %s90 = sphi 0, %s89
      %s106 = sphi 0, %s90
      %s114 = sphi 0, %s116
      %s117 = sphi 0, %s114
      %s118 = sphi 0, %s117
      %s134 = sphi 0, %s118
    $region4: #{tpu_custom_call.1} parent=1 // loop_header_branch
      %15 = sbr.rel (%p13) target = $region8
    $region5: #{tpu_custom_call.1} parent=1 // loop_body
      %s17 = ssub.s32 %s12, 1
      %s18 = ssub.s32 %s12, 2
      %s25 = sadd.s32 1, %s20
      %p26 = scmp.ge.s32.totalorder %s25, 1
      %s27 = scalar_select %p26, 0, %s25
      %s28 = sadd.s32 1, %s19
      %s29 = scalar_select %p26, %s28, %s19
      %p30 = scmp.ge.s32.totalorder %s29, 2
      %s31 = scalar_select %p30, 0, %s29
      %s32 = ssub.s32 %s19, %s31
      %p33 = scmp.eq.s32.totalorder %s32, 0
      %s35 = sadd.s32 %s34, 1
      %s36 = scalar_select %p33, %s34, %s35
      %p39 = pneg %p33
      %p40 = scmp.eq.s32.totalorder %s12, 1
      %p41 = por %p39, %p40
      %p42 = scmp.ne.s32.totalorder %s34, %s37
      %p43 = scmp.eq.s32.totalorder %s12, 0
      %p44 = por %p42, %p43
      %p45 = scmp.ne.s32.totalorder %s34, %s37
      %p46 = scmp.eq.s32.totalorder %s17, 1
      %p47 = por %p45, %p46
      %p48 = scmp.ne.s32.totalorder %s37, %s38
      %p49 = scmp.eq.s32.totalorder %s17, 0
      %p50 = por %p48, %p49
      %p51 = scmp.ne.s32.totalorder %s37, %s38
      %p52 = scmp.eq.s32.totalorder %s18, 1
      %p53 = por %p51, %p52
      %p55 = scmp.ne.s32.totalorder %s38, %s54
      %p56 = scmp.eq.s32.totalorder %s18, 0
      %p57 = por %p55, %p56
      %s58 = ssub.s32 %s20, %s27
      %p59 = scmp.eq.s32.totalorder %s58, 0
      %s61 = sadd.s32 %s60, 1
      %s62 = scalar_select %p59, %s60, %s61
      %p65 = pneg %p59
      %p66 = scmp.eq.s32.totalorder %s12, 1
      %p67 = por %p65, %p66
      %p68 = scmp.ne.s32.totalorder %s60, %s63
      %p69 = scmp.eq.s32.totalorder %s12, 0
      %p70 = por %p68, %p69
      %p71 = scmp.ne.s32.totalorder %s60, %s63
      %p72 = scmp.eq.s32.totalorder %s17, 1
      %p73 = por %p71, %p72
      %p74 = scmp.ne.s32.totalorder %s63, %s64
      %p75 = scmp.eq.s32.totalorder %s17, 0
      %p76 = por %p74, %p75
      %p77 = scmp.ne.s32.totalorder %s63, %s64
      %p78 = scmp.eq.s32.totalorder %s18, 1
      %p79 = por %p77, %p78
      %p81 = scmp.ne.s32.totalorder %s64, %s80
      %p82 = scmp.eq.s32.totalorder %s18, 0
      %p83 = por %p81, %p82
      %s84 = ssub.s32 %s20, %s27
      %p85 = scmp.eq.s32.totalorder %s84, 0
      %s87 = sadd.s32 %s86, 1
      %s88 = scalar_select %p85, %s86, %s87
      %p91 = pneg %p85
      %p92 = scmp.eq.s32.totalorder %s12, 1
      %p93 = por %p91, %p92
      %p94 = scmp.ne.s32.totalorder %s86, %s89
      %p95 = scmp.eq.s32.totalorder %s12, 0
      %p96 = por %p94, %p95
      %p97 = scmp.ne.s32.totalorder %s86, %s89
      %p98 = scmp.eq.s32.totalorder %s17, 1
      %p99 = por %p97, %p98
      %p100 = scmp.ne.s32.totalorder %s89, %s90
      %p101 = scmp.eq.s32.totalorder %s17, 0
      %p102 = por %p100, %p101
      %p103 = scmp.ne.s32.totalorder %s89, %s90
      %p104 = scmp.eq.s32.totalorder %s18, 1
      %p105 = por %p103, %p104
      %p107 = scmp.ne.s32.totalorder %s90, %s106
      %p108 = scmp.eq.s32.totalorder %s18, 0
      %p109 = por %p107, %p108
      %s110 = ssub.s32 %s19, %s31
      %s111 = ssub.s32 %s20, %s27
      %s112 = sor.u32 %s110, %s111
      %p113 = scmp.eq.s32.totalorder %s112, 0
      %s115 = sadd.s32 %s114, 1
      %s116 = scalar_select %p113, %s114, %s115
      %p119 = pneg %p113
      %p120 = scmp.eq.s32.totalorder %s12, 1
      %p121 = por %p119, %p120
      %p122 = scmp.ne.s32.totalorder %s114, %s117
      %p123 = scmp.eq.s32.totalorder %s12, 0
      %p124 = por %p122, %p123
      %p125 = scmp.ne.s32.totalorder %s114, %s117
      %p126 = scmp.eq.s32.totalorder %s17, 1
      %p127 = por %p125, %p126
      %p128 = scmp.ne.s32.totalorder %s117, %s118
      %p129 = scmp.eq.s32.totalorder %s17, 0
      %p130 = por %p128, %p129
      %p131 = scmp.ne.s32.totalorder %s117, %s118
      %p132 = scmp.eq.s32.totalorder %s18, 1
      %p133 = por %p131, %p132
      %p135 = scmp.ne.s32.totalorder %s118, %s134
      %p136 = scmp.eq.s32.totalorder %s18, 0
      %p137 = por %p135, %p136
      %p138 = scmp.le.s32.totalorder 1, %s12
      %p139 = scmp.lt.s32.totalorder %s12, 3
      %p140 = pnand %p138, %p139
      %p141 = pneg %p140
      // Predicated region
      $region9: #{tpu_custom_call.1} parent=5 // pred_check
        _
      $region10: #{tpu_custom_call.1} parent=5 // pred_check_branch
        %143 = sbr.rel (%p140) target = $region12
      $region11: #{tpu_custom_call.1} parent=5 // pred_region
        %s144 = ssub.s32 %s12, 1
        // Predicated region
        $region13: #{tpu_custom_call.1} parent=11 // pred_check
          %p145 = pneg %p76
        $region14: #{tpu_custom_call.1} parent=11 // pred_check_branch
          %147 = sbr.rel (%p145) target = $region16
        $region15: #{tpu_custom_call.1} parent=11 // pred_region
          %p148 = scmp.lt.s32.totalorder %s22, 0
          %s149 = scalar_select %p148, %s22, 0
          %s150 = smul.addr %s149, 4
          %s151 = scalar_lea.vmem %s1, %s150
        $region16: #{tpu_custom_call.1} parent=11 // pred_fallthru
          _
        // Predicated region
        $region17: #{tpu_custom_call.1} parent=11 // pred_check
          %p152 = pneg %p102
        $region18: #{tpu_custom_call.1} parent=11 // pred_check_branch
          %154 = sbr.rel (%p152) target = $region20
        $region19: #{tpu_custom_call.1} parent=11 // pred_region
          %p155 = scmp.lt.s32.totalorder %s22, 0
          %s156 = scalar_select %p155, %s22, 0
          %s157 = scalar_lea.vmem %s2, %s156
        $region20: #{tpu_custom_call.1} parent=11 // pred_fallthru
          _
      $region12: #{tpu_custom_call.1} parent=5 // pred_fallthru
        _
      %p158 = scmp.lt.s32.totalorder %s12, 2
      // Predicated region
      $region21: #{tpu_custom_call.1} parent=5 // pred_check
        %p159 = pneg %p158
      $region22: #{tpu_custom_call.1} parent=5 // pred_check_branch
        %161 = sbr.rel (%p159) target = $region24
      $region23: #{tpu_custom_call.1} parent=5 // pred_region
        // Predicated region
        $region25: #{tpu_custom_call.1} parent=23 // pred_check
          %p162 = pneg %p44
        $region26: #{tpu_custom_call.1} parent=23 // pred_check_branch
          %164 = sbr.rel (%p162) target = $region28
        $region27: #{tpu_custom_call.1} parent=23 // pred_region
          %s165 = smul.u32 64, %s19
          %p166 = scmp.lt.s32.totalorder %s165, 127
          %s167 = scalar_select %p166, %s165, 127
          %s168 = smul.addr %s167, 4
          %s169 = scalar_lea.vmem %s0, %s168
          %s170 = smul.u32 64, %s19
        $region28: #{tpu_custom_call.1} parent=23 // pred_fallthru
          _
      $region24: #{tpu_custom_call.1} parent=5 // pred_fallthru
        _
      %p171 = scmp.le.s32.totalorder 1, %s12
      %p172 = scmp.lt.s32.totalorder %s12, 3
      %p173 = pnand %p171, %p172
      %p174 = pneg %p173
      // Predicated region
      $region29: #{tpu_custom_call.1} parent=5 // pred_check
        _
      $region30: #{tpu_custom_call.1} parent=5 // pred_check_branch
        %176 = sbr.rel (%p173) target = $region32
      $region31: #{tpu_custom_call.1} parent=5 // pred_region
        %s177 = ssub.s32 %s12, 1
        %s178 = smul.u32 64, %s21
        %p179 = scmp.lt.s32.totalorder %s178, 127
        %s180 = scalar_select %p179, %s178, 127
        %s181 = smul.addr %s180, 4
        %s182 = scalar_lea.vmem %s0, %s181
        %p183 = pneg %p50
        %p184 = pneg %p47
        %p185 = scmp.lt.s32.totalorder %s22, 0
        %s186 = scalar_select %p185, %s22, 0
        %s187 = smul.addr %s186, 4
        %s188 = scalar_lea.vmem %s1, %s187
        %p189 = pneg %p76
        %p190 = pneg %p73
        %p191 = scmp.lt.s32.totalorder %s22, 0
        %s192 = scalar_select %p191, %s22, 0
        %s193 = scalar_lea.vmem %s2, %s192
        %p194 = pneg %p102
        %p195 = pneg %p99
        %p196 = pneg %p130
        %p197 = pneg %p127
        %s198 = sand.u32 %s117, 1
        %s199 = scalar_lea.sflag [#allocation3], %s198
        %s200 = sand.u32 %s117, 1
        %s201 = smul.addr %s200, 256
        %s202 = scalar_lea.vmem [#allocation2], %s201
        %s203 = smul.u32 64, %s21
        %p204 = scmp.lt.s32.totalorder %s203, 127
        %s205 = scalar_select %p204, %s203, 127
        %s206 = smul.addr %s205, 4
        %s207 = scalar_lea.vmem %s0, %s206
        %s208 = smul.u32 64, %s21
        %p209 = scmp.lt.s32.totalorder %s22, 0
        %s210 = scalar_select %p209, %s22, 0
        %s211 = smul.addr %s210, 4
        %s212 = scalar_lea.vmem %s1, %s211
        %p213 = scmp.lt.s32.totalorder %s22, 0
        %s214 = scalar_select %p213, %s22, 0
        %s215 = scalar_lea.vmem %s2, %s214
        %s216 = smul.u32 64, %s21
        %v218 = vld [vmem:[%s207] sm:$0xf]
        %v219 = vld [vmem:[%s207 + $0x4] sm:$0xf]
        %v220 = vld [vmem:[%s207 + $0x8] sm:$0xf]
        %v221 = vld [vmem:[%s207 + $0xc] sm:$0xf]
        %v222 = vld [vmem:[%s207 + $0x10] sm:$0xf]
        %v223 = vld [vmem:[%s207 + $0x14] sm:$0xf]
        %v224 = vld [vmem:[%s207 + $0x18] sm:$0xf]
        %v225 = vld [vmem:[%s207 + $0x1c] sm:$0xf]
        %v226 = vld [vmem:[%s207 + $0x20] sm:$0xf]
        %v227 = vld [vmem:[%s207 + $0x24] sm:$0xf]
        %v228 = vld [vmem:[%s207 + $0x28] sm:$0xf]
        %v229 = vld [vmem:[%s207 + $0x2c] sm:$0xf]
        %v230 = vld [vmem:[%s207 + $0x30] sm:$0xf]
        %v231 = vld [vmem:[%s207 + $0x34] sm:$0xf]
        %v232 = vld [vmem:[%s207 + $0x38] sm:$0xf]
        %v233 = vld [vmem:[%s207 + $0x3c] sm:$0xf]
        %v234 = vld [vmem:[%s207 + $0x40] sm:$0xf]
        %v235 = vld [vmem:[%s207 + $0x44] sm:$0xf]
        %v236 = vld [vmem:[%s207 + $0x48] sm:$0xf]
        %v237 = vld [vmem:[%s207 + $0x4c] sm:$0xf]
        %v238 = vld [vmem:[%s207 + $0x50] sm:$0xf]
        %v239 = vld [vmem:[%s207 + $0x54] sm:$0xf]
        %v240 = vld [vmem:[%s207 + $0x58] sm:$0xf]
        %v241 = vld [vmem:[%s207 + $0x5c] sm:$0xf]
        %v242 = vld [vmem:[%s207 + $0x60] sm:$0xf]
        %v243 = vld [vmem:[%s207 + $0x64] sm:$0xf]
        %v244 = vld [vmem:[%s207 + $0x68] sm:$0xf]
        %v245 = vld [vmem:[%s207 + $0x6c] sm:$0xf]
        %v246 = vld [vmem:[%s207 + $0x70] sm:$0xf]
        %v247 = vld [vmem:[%s207 + $0x74] sm:$0xf]
        %v248 = vld [vmem:[%s207 + $0x78] sm:$0xf]
        %v249 = vld [vmem:[%s207 + $0x7c] sm:$0xf]
        %v250 = vld [vmem:[%s207 + $0x80] sm:$0xf]
        %v251 = vld [vmem:[%s207 + $0x84] sm:$0xf]
        %v252 = vld [vmem:[%s207 + $0x88] sm:$0xf]
        %v253 = vld [vmem:[%s207 + $0x8c] sm:$0xf]
        %v254 = vld [vmem:[%s207 + $0x90] sm:$0xf]
        %v255 = vld [vmem:[%s207 + $0x94] sm:$0xf]
        %v256 = vld [vmem:[%s207 + $0x98] sm:$0xf]
        %v257 = vld [vmem:[%s207 + $0x9c] sm:$0xf]
        %v258 = vld [vmem:[%s207 + $0xa0] sm:$0xf]
        %v259 = vld [vmem:[%s207 + $0xa4] sm:$0xf]
        %v260 = vld [vmem:[%s207 + $0xa8] sm:$0xf]
        %v261 = vld [vmem:[%s207 + $0xac] sm:$0xf]
        %v262 = vld [vmem:[%s207 + $0xb0] sm:$0xf]
        %v263 = vld [vmem:[%s207 + $0xb4] sm:$0xf]
        %v264 = vld [vmem:[%s207 + $0xb8] sm:$0xf]
        %v265 = vld [vmem:[%s207 + $0xbc] sm:$0xf]
        %v266 = vld [vmem:[%s207 + $0xc0] sm:$0xf]
        %v267 = vld [vmem:[%s207 + $0xc4] sm:$0xf]
        %v268 = vld [vmem:[%s207 + $0xc8] sm:$0xf]
        %v269 = vld [vmem:[%s207 + $0xcc] sm:$0xf]
        %v270 = vld [vmem:[%s207 + $0xd0] sm:$0xf]
        %v271 = vld [vmem:[%s207 + $0xd4] sm:$0xf]
        %v272 = vld [vmem:[%s207 + $0xd8] sm:$0xf]
        %v273 = vld [vmem:[%s207 + $0xdc] sm:$0xf]
        %v274 = vld [vmem:[%s207 + $0xe0] sm:$0xf]
        %v275 = vld [vmem:[%s207 + $0xe4] sm:$0xf]
        %v276 = vld [vmem:[%s207 + $0xe8] sm:$0xf]
        %v277 = vld [vmem:[%s207 + $0xec] sm:$0xf]
        %v278 = vld [vmem:[%s207 + $0xf0] sm:$0xf]
        %v279 = vld [vmem:[%s207 + $0xf4] sm:$0xf]
        %v280 = vld [vmem:[%s207 + $0xf8] sm:$0xf]
        %v281 = vld [vmem:[%s207 + $0xfc] sm:$0xf]
        %v282 = vld [vmem:[%s212] sm:$0xf]
        %v283 = vld [vmem:[%s212 + $0x4] sm:$0xf]
        %v284 = vld [vmem:[%s212 + $0x8] sm:$0x1]
        %v285 = vld [vmem:[%s215] sm:$0x1]
        %v287 = vlaneseq
        %v288 = vshrl.u32 %v287, 7
        %v289 = vsub.s32 0, %v288
        %v290 = vrot.slane %v285, %v289
        %v356 = vunpack.c.l.b16 %v218
        %v357 = vunpack.c.l.b16 %v219
        %v358 = vunpack.c.l.b16 %v220
        %v359 = vunpack.c.l.b16 %v221
        %v360 = vunpack.c.l.b16 %v222
        %v361 = vunpack.c.l.b16 %v223
        %v362 = vunpack.c.l.b16 %v224
        %v363 = vunpack.c.l.b16 %v225
        %v364 = vunpack.c.l.b16 %v226
        %v365 = vunpack.c.l.b16 %v227
        %v366 = vunpack.c.l.b16 %v228
        %v367 = vunpack.c.l.b16 %v229
        %v368 = vunpack.c.l.b16 %v230
        %v369 = vunpack.c.l.b16 %v231
        %v370 = vunpack.c.l.b16 %v232
        %v371 = vunpack.c.l.b16 %v233
        %v372 = vunpack.c.l.b16 %v234
        %v373 = vunpack.c.l.b16 %v235
        %v374 = vunpack.c.l.b16 %v236
        %v375 = vunpack.c.l.b16 %v237
        %v376 = vunpack.c.l.b16 %v238
        %v377 = vunpack.c.l.b16 %v239
        %v378 = vunpack.c.l.b16 %v240
        %v379 = vunpack.c.l.b16 %v241
        %v380 = vunpack.c.l.b16 %v242
        %v381 = vunpack.c.l.b16 %v243
        %v382 = vunpack.c.l.b16 %v244
        %v383 = vunpack.c.l.b16 %v245
        %v384 = vunpack.c.l.b16 %v246
        %v385 = vunpack.c.l.b16 %v247
        %v386 = vunpack.c.l.b16 %v248
        %v387 = vunpack.c.l.b16 %v249
        %v388 = vunpack.c.l.b16 %v250
        %v389 = vunpack.c.l.b16 %v251
        %v390 = vunpack.c.l.b16 %v252
        %v391 = vunpack.c.l.b16 %v253
        %v392 = vunpack.c.l.b16 %v254
        %v393 = vunpack.c.l.b16 %v255
        %v394 = vunpack.c.l.b16 %v256
        %v395 = vunpack.c.l.b16 %v257
        %v396 = vunpack.c.l.b16 %v258
        %v397 = vunpack.c.l.b16 %v259
        %v398 = vunpack.c.l.b16 %v260
        %v399 = vunpack.c.l.b16 %v261
        %v400 = vunpack.c.l.b16 %v262
        %v401 = vunpack.c.l.b16 %v263
        %v402 = vunpack.c.l.b16 %v264
        %v403 = vunpack.c.l.b16 %v265
        %v404 = vunpack.c.l.b16 %v266
        %v405 = vunpack.c.l.b16 %v267
        %v406 = vunpack.c.l.b16 %v268
        %v407 = vunpack.c.l.b16 %v269
        %v408 = vunpack.c.l.b16 %v270
        %v409 = vunpack.c.l.b16 %v271
        %v410 = vunpack.c.l.b16 %v272
        %v411 = vunpack.c.l.b16 %v273
        %v412 = vunpack.c.l.b16 %v274
        %v413 = vunpack.c.l.b16 %v275
        %v414 = vunpack.c.l.b16 %v276
        %v415 = vunpack.c.l.b16 %v277
        %v416 = vunpack.c.l.b16 %v278
        %v417 = vunpack.c.l.b16 %v279
        %v418 = vunpack.c.l.b16 %v280
        %v419 = vunpack.c.l.b16 %v281
        %v420 = vpack.c.b16 %v357, %v356
        %v421 = vpack.c.b16 %v359, %v358
        %v422 = vpack.c.b16 %v361, %v360
        %v423 = vpack.c.b16 %v363, %v362
        %v424 = vpack.c.b16 %v365, %v364
        %v425 = vpack.c.b16 %v367, %v366
        %v426 = vpack.c.b16 %v369, %v368
        %v427 = vpack.c.b16 %v371, %v370
        %v428 = vpack.c.b16 %v373, %v372
        %v429 = vpack.c.b16 %v375, %v374
        %v430 = vpack.c.b16 %v377, %v376
        %v431 = vpack.c.b16 %v379, %v378
        %v432 = vpack.c.b16 %v381, %v380
        %v433 = vpack.c.b16 %v383, %v382
        %v434 = vpack.c.b16 %v385, %v384
        %v435 = vpack.c.b16 %v387, %v386
        %v436 = vpack.c.b16 %v389, %v388
        %v437 = vpack.c.b16 %v391, %v390
        %v438 = vpack.c.b16 %v393, %v392
        %v439 = vpack.c.b16 %v395, %v394
        %v440 = vpack.c.b16 %v397, %v396
        %v441 = vpack.c.b16 %v399, %v398
        %v442 = vpack.c.b16 %v401, %v400
        %v443 = vpack.c.b16 %v403, %v402
        %v444 = vpack.c.b16 %v405, %v404
        %v445 = vpack.c.b16 %v407, %v406
        %v446 = vpack.c.b16 %v409, %v408
        %v447 = vpack.c.b16 %v411, %v410
        %v448 = vpack.c.b16 %v413, %v412
        %v449 = vpack.c.b16 %v415, %v414
        %v450 = vpack.c.b16 %v417, %v416
        %v451 = vpack.c.b16 %v419, %v418
        %v455 = vunpack.c.l.b16 %v282
        %v456 = vunpack.c.l.b16 %v283
        %v457 = vunpack.c.l.b16 %v284
        %v458 = vpack.c.b16 %v456, %v455
        %v459 = vpack.c.b16 %v457, %v457
        %vm461 = vcmask 146432
        %v463 = vsel %vm461, %v420, 0
        %v466 = vsel %vm461, %v421, 0
        %v469 = vsel %vm461, %v422, 0
        %v472 = vsel %vm461, %v423, 0
        %v475 = vsel %vm461, %v424, 0
        %v478 = vsel %vm461, %v425, 0
        %v481 = vsel %vm461, %v426, 0
        %v484 = vsel %vm461, %v427, 0
        %v487 = vsel %vm461, %v428, 0
        %v490 = vsel %vm461, %v429, 0
        %v493 = vsel %vm461, %v430, 0
        %v496 = vsel %vm461, %v431, 0
        %v499 = vsel %vm461, %v432, 0
        %v502 = vsel %vm461, %v433, 0
        %v505 = vsel %vm461, %v434, 0
        %v508 = vsel %vm461, %v435, 0
        %v511 = vsel %vm461, %v436, 0
        %v514 = vsel %vm461, %v437, 0
        %v517 = vsel %vm461, %v438, 0
        %v520 = vsel %vm461, %v439, 0
        %v523 = vsel %vm461, %v440, 0
        %v526 = vsel %vm461, %v441, 0
        %v529 = vsel %vm461, %v442, 0
        %v532 = vsel %vm461, %v443, 0
        %v535 = vsel %vm461, %v444, 0
        %v538 = vsel %vm461, %v445, 0
        %v541 = vsel %vm461, %v446, 0
        %v544 = vsel %vm461, %v447, 0
        %v547 = vsel %vm461, %v448, 0
        %v550 = vsel %vm461, %v449, 0
        %v553 = vsel %vm461, %v450, 0
        %v556 = vsel %vm461, %v451, 0
        %vm558 = vcmask 1040384
        %v560 = vsel %vm558, %v459, 0
        %562 = vmatprep.subr.bf16.mxu0 0
        %563 = vmatpush1.bf16.msra.mxu0 %v458
        %564 = vmatprep.subr.bf16.mxu0 0
        %565 = vmatpush1.bf16.msra.mxu0 %v560
        %566 = vmatprep.subr.bf16.mxu0 0
        %567 = vmatpush1.bf16.msra.mxu0 0
        %568 = vmatprep.subr.bf16.mxu0 0
        %569 = vmatpush1.bf16.msra.mxu0 0
        %570 = vmatprep.subr.bf16.mxu0 0
        %571 = vmatpush1.bf16.msra.mxu0 0
        %572 = vmatprep.subr.bf16.mxu0 0
        %573 = vmatpush1.bf16.msra.mxu0 0
        %574 = vmatprep.subr.bf16.mxu0 0
        %575 = vmatpush1.bf16.msra.mxu0 0
        %576 = vmatprep.subr.bf16.mxu0 0
        %577 = vmatpush1.bf16.msra.mxu0 0
        %578 = vmatprep.subr.bf16.mxu0 0
        %579 = vmatpush1.bf16.msra.mxu0 0
        %580 = vmatprep.subr.bf16.mxu0 0
        %581 = vmatpush1.bf16.msra.mxu0 0
        %582 = vmatprep.subr.bf16.mxu0 0
        %583 = vmatpush1.bf16.msra.mxu0 0
        %584 = vmatprep.subr.bf16.mxu0 0
        %585 = vmatpush1.bf16.msra.mxu0 0
        %586 = vmatprep.subr.bf16.mxu0 0
        %587 = vmatpush1.bf16.msra.mxu0 0
        %588 = vmatprep.subr.bf16.mxu0 0
        %589 = vmatpush1.bf16.msra.mxu0 0
        %590 = vmatprep.subr.bf16.mxu0 0
        %591 = vmatpush1.bf16.msra.mxu0 0
        %592 = vmatprep.subr.bf16.mxu0 0
        %593 = vmatpush1.bf16.msra.mxu0 0
        %594 = vmatprep.mubr.bf16.mxu0 0
        %595 = vmatmul.mubr.bf16.gmra.mrb[0].mxu0 %v463
        %v596 = vpop.f32.mrb[0].mxu0
        %v597 = vadd.f32 %v290, %v596
        %v598 = vpop.f32.mrb[0].mxu0
        %v599 = vpop.f32.mrb[0].mxu0
        %v600 = vadd.f32 %v290, %v599
        %v601 = vpop.f32.mrb[0].mxu0
        %602 = vmatprep.mubr.bf16.mxu0 0
        %603 = vmatmul.mubr.bf16.gmra.mrb[0].mxu0 %v466
        %v604 = vpop.f32.mrb[0].mxu0
        %v605 = vadd.f32 %v290, %v604
        %v606 = vpop.f32.mrb[0].mxu0
        %v607 = vpop.f32.mrb[0].mxu0
        %v608 = vadd.f32 %v290, %v607
        %v609 = vpop.f32.mrb[0].mxu0
        %610 = vmatprep.mubr.bf16.mxu0 0
        %611 = vmatmul.mubr.bf16.gmra.mrb[0].mxu0 %v469
        %v612 = vpop.f32.mrb[0].mxu0
        %v613 = vadd.f32 %v290, %v612
        %v614 = vpop.f32.mrb[0].mxu0
        %v615 = vpop.f32.mrb[0].mxu0
        %v616 = vadd.f32 %v290, %v615
        %v617 = vpop.f32.mrb[0].mxu0
        %618 = vmatprep.mubr.bf16.mxu0 0
        %619 = vmatmul.mubr.bf16.gmra.mrb[0].mxu0 %v472
        %v620 = vpop.f32.mrb[0].mxu0
        %v621 = vadd.f32 %v290, %v620
        %v622 = vpop.f32.mrb[0].mxu0
        %v623 = vpop.f32.mrb[0].mxu0
        %v624 = vadd.f32 %v290, %v623
        %v625 = vpop.f32.mrb[0].mxu0
        %626 = vmatprep.mubr.bf16.mxu0 0
        %627 = vmatmul.mubr.bf16.gmra.mrb[0].mxu0 %v475
        %v628 = vpop.f32.mrb[0].mxu0
        %v629 = vadd.f32 %v290, %v628
        %v630 = vpop.f32.mrb[0].mxu0
        %v631 = vpop.f32.mrb[0].mxu0
        %v632 = vadd.f32 %v290, %v631
        %v633 = vpop.f32.mrb[0].mxu0
        %634 = vmatprep.mubr.bf16.mxu0 0
        %635 = vmatmul.mubr.bf16.gmra.mrb[0].mxu0 %v478
        %v636 = vpop.f32.mrb[0].mxu0
        %v637 = vadd.f32 %v290, %v636
        %v638 = vpop.f32.mrb[0].mxu0
        %v639 = vpop.f32.mrb[0].mxu0
        %v640 = vadd.f32 %v290, %v639
        %v641 = vpop.f32.mrb[0].mxu0
        %642 = vmatprep.mubr.bf16.mxu0 0
        %643 = vmatmul.mubr.bf16.gmra.mrb[0].mxu0 %v481
        %v644 = vpop.f32.mrb[0].mxu0
        %v645 = vadd.f32 %v290, %v644
        %v646 = vpop.f32.mrb[0].mxu0
        %v647 = vpop.f32.mrb[0].mxu0
        %v648 = vadd.f32 %v290, %v647
        %v649 = vpop.f32.mrb[0].mxu0
        %650 = vmatprep.mubr.bf16.mxu0 0
        %651 = vmatmul.mubr.bf16.gmra.mrb[0].mxu0 %v484
        %v652 = vpop.f32.mrb[0].mxu0
        %v653 = vadd.f32 %v290, %v652
        %v654 = vpop.f32.mrb[0].mxu0
        %v655 = vpop.f32.mrb[0].mxu0
        %v656 = vadd.f32 %v290, %v655
        %v657 = vpop.f32.mrb[0].mxu0
        %658 = vmatprep.mubr.bf16.mxu0 0
        %659 = vmatmul.mubr.bf16.gmra.mrb[0].mxu0 %v487
        %v660 = vpop.f32.mrb[0].mxu0
        %v661 = vadd.f32 %v290, %v660
        %v662 = vpop.f32.mrb[0].mxu0
        %v663 = vpop.f32.mrb[0].mxu0
        %v664 = vadd.f32 %v290, %v663
        %v665 = vpop.f32.mrb[0].mxu0
        %666 = vmatprep.mubr.bf16.mxu0 0
        %667 = vmatmul.mubr.bf16.gmra.mrb[0].mxu0 %v490
        %v668 = vpop.f32.mrb[0].mxu0
        %v669 = vadd.f32 %v290, %v668
        %v670 = vpop.f32.mrb[0].mxu0
        %v671 = vpop.f32.mrb[0].mxu0
        %v672 = vadd.f32 %v290, %v671
        %v673 = vpop.f32.mrb[0].mxu0
        %674 = vmatprep.mubr.bf16.mxu0 0
        %675 = vmatmul.mubr.bf16.gmra.mrb[0].mxu0 %v493
        %v676 = vpop.f32.mrb[0].mxu0
        %v677 = vadd.f32 %v290, %v676
        %v678 = vpop.f32.mrb[0].mxu0
        %v679 = vpop.f32.mrb[0].mxu0
        %v680 = vadd.f32 %v290, %v679
        %v681 = vpop.f32.mrb[0].mxu0
        %682 = vmatprep.mubr.bf16.mxu0 0
        %683 = vmatmul.mubr.bf16.gmra.mrb[0].mxu0 %v496
        %v684 = vpop.f32.mrb[0].mxu0
        %v685 = vadd.f32 %v290, %v684
        %v686 = vpop.f32.mrb[0].mxu0
        %v687 = vpop.f32.mrb[0].mxu0
        %v688 = vadd.f32 %v290, %v687
        %v689 = vpop.f32.mrb[0].mxu0
        %690 = vmatprep.mubr.bf16.mxu0 0
        %691 = vmatmul.mubr.bf16.gmra.mrb[0].mxu0 %v499
        %v692 = vpop.f32.mrb[0].mxu0
        %v693 = vadd.f32 %v290, %v692
        %v694 = vpop.f32.mrb[0].mxu0
        %v695 = vpop.f32.mrb[0].mxu0
        %v696 = vadd.f32 %v290, %v695
        %v697 = vpop.f32.mrb[0].mxu0
        %698 = vmatprep.mubr.bf16.mxu0 0
        %699 = vmatmul.mubr.bf16.gmra.mrb[0].mxu0 %v502
        %v700 = vpop.f32.mrb[0].mxu0
        %v701 = vadd.f32 %v290, %v700
        %v702 = vpop.f32.mrb[0].mxu0
        %v703 = vpop.f32.mrb[0].mxu0
        %v704 = vadd.f32 %v290, %v703
        %v705 = vpop.f32.mrb[0].mxu0
        %706 = vmatprep.mubr.bf16.mxu0 0
        %707 = vmatmul.mubr.bf16.gmra.mrb[0].mxu0 %v505
        %v708 = vpop.f32.mrb[0].mxu0
        %v709 = vadd.f32 %v290, %v708
        %v710 = vpop.f32.mrb[0].mxu0
        %v711 = vpop.f32.mrb[0].mxu0
        %v712 = vadd.f32 %v290, %v711
        %v713 = vpop.f32.mrb[0].mxu0
        %714 = vmatprep.mubr.bf16.mxu0 0
        %715 = vmatmul.mubr.bf16.gmra.mrb[0].mxu0 %v508
        %v716 = vpop.f32.mrb[0].mxu0
        %v717 = vadd.f32 %v290, %v716
        %v718 = vpop.f32.mrb[0].mxu0
        %v719 = vpop.f32.mrb[0].mxu0
        %v720 = vadd.f32 %v290, %v719
        %v721 = vpop.f32.mrb[0].mxu0
        %722 = vmatprep.mubr.bf16.mxu0 0
        %723 = vmatmul.mubr.bf16.gmra.mrb[0].mxu0 %v511
        %v724 = vpop.f32.mrb[0].mxu0
        %v725 = vadd.f32 %v290, %v724
        %v726 = vpop.f32.mrb[0].mxu0
        %v727 = vpop.f32.mrb[0].mxu0
        %v728 = vadd.f32 %v290, %v727
        %v729 = vpop.f32.mrb[0].mxu0
        %730 = vmatprep.mubr.bf16.mxu0 0
        %731 = vmatmul.mubr.bf16.gmra.mrb[0].mxu0 %v514
        %v732 = vpop.f32.mrb[0].mxu0
        %v733 = vadd.f32 %v290, %v732
        %v734 = vpop.f32.mrb[0].mxu0
        %v735 = vpop.f32.mrb[0].mxu0
        %v736 = vadd.f32 %v290, %v735
        %v737 = vpop.f32.mrb[0].mxu0
        %738 = vmatprep.mubr.bf16.mxu0 0
        %739 = vmatmul.mubr.bf16.gmra.mrb[0].mxu0 %v517
        %v740 = vpop.f32.mrb[0].mxu0
        %v741 = vadd.f32 %v290, %v740
        %v742 = vpop.f32.mrb[0].mxu0
        %v743 = vpop.f32.mrb[0].mxu0
        %v744 = vadd.f32 %v290, %v743
        %v745 = vpop.f32.mrb[0].mxu0
        %746 = vmatprep.mubr.bf16.mxu0 0
        %747 = vmatmul.mubr.bf16.gmra.mrb[0].mxu0 %v520
        %v748 = vpop.f32.mrb[0].mxu0
        %v749 = vadd.f32 %v290, %v748
        %v750 = vpop.f32.mrb[0].mxu0
        %v751 = vpop.f32.mrb[0].mxu0
        %v752 = vadd.f32 %v290, %v751
        %v753 = vpop.f32.mrb[0].mxu0
        %754 = vmatprep.mubr.bf16.mxu0 0
        %755 = vmatmul.mubr.bf16.gmra.mrb[0].mxu0 %v523
        %v756 = vpop.f32.mrb[0].mxu0
        %v757 = vadd.f32 %v290, %v756
        %v758 = vpop.f32.mrb[0].mxu0
        %v759 = vpop.f32.mrb[0].mxu0
        %v760 = vadd.f32 %v290, %v759
        %v761 = vpop.f32.mrb[0].mxu0
        %762 = vmatprep.mubr.bf16.mxu0 0
        %763 = vmatmul.mubr.bf16.gmra.mrb[0].mxu0 %v526
        %v764 = vpop.f32.mrb[0].mxu0
        %v765 = vadd.f32 %v290, %v764
        %v766 = vpop.f32.mrb[0].mxu0
        %v767 = vpop.f32.mrb[0].mxu0
        %v768 = vadd.f32 %v290, %v767
        %v769 = vpop.f32.mrb[0].mxu0
        %770 = vmatprep.mubr.bf16.mxu0 0
        %771 = vmatmul.mubr.bf16.gmra.mrb[0].mxu0 %v529
        %v772 = vpop.f32.mrb[0].mxu0
        %v773 = vadd.f32 %v290, %v772
        %v774 = vpop.f32.mrb[0].mxu0
        %v775 = vpop.f32.mrb[0].mxu0
        %v776 = vadd.f32 %v290, %v775
        %v777 = vpop.f32.mrb[0].mxu0
        %778 = vmatprep.mubr.bf16.mxu0 0
        %779 = vmatmul.mubr.bf16.gmra.mrb[0].mxu0 %v532
        %v780 = vpop.f32.mrb[0].mxu0
        %v781 = vadd.f32 %v290, %v780
        %v782 = vpop.f32.mrb[0].mxu0
        %v783 = vpop.f32.mrb[0].mxu0
        %v784 = vadd.f32 %v290, %v783
        %v785 = vpop.f32.mrb[0].mxu0
        %786 = vmatprep.mubr.bf16.mxu0 0
        %787 = vmatmul.mubr.bf16.gmra.mrb[0].mxu0 %v535
        %v788 = vpop.f32.mrb[0].mxu0
        %v789 = vadd.f32 %v290, %v788
        %v790 = vpop.f32.mrb[0].mxu0
        %v791 = vpop.f32.mrb[0].mxu0
        %v792 = vadd.f32 %v290, %v791
        %v793 = vpop.f32.mrb[0].mxu0
        %794 = vmatprep.mubr.bf16.mxu0 0
        %795 = vmatmul.mubr.bf16.gmra.mrb[0].mxu0 %v538
        %v796 = vpop.f32.mrb[0].mxu0
        %v797 = vadd.f32 %v290, %v796
        %v798 = vpop.f32.mrb[0].mxu0
        %v799 = vpop.f32.mrb[0].mxu0
        %v800 = vadd.f32 %v290, %v799
        %v801 = vpop.f32.mrb[0].mxu0
        %802 = vmatprep.mubr.bf16.mxu0 0
        %803 = vmatmul.mubr.bf16.gmra.mrb[0].mxu0 %v541
        %v804 = vpop.f32.mrb[0].mxu0
        %v805 = vadd.f32 %v290, %v804
        %v806 = vpop.f32.mrb[0].mxu0
        %v807 = vpop.f32.mrb[0].mxu0
        %v808 = vadd.f32 %v290, %v807
        %v809 = vpop.f32.mrb[0].mxu0
        %810 = vmatprep.mubr.bf16.mxu0 0
        %811 = vmatmul.mubr.bf16.gmra.mrb[0].mxu0 %v544
        %v812 = vpop.f32.mrb[0].mxu0
        %v813 = vadd.f32 %v290, %v812
        %v814 = vpop.f32.mrb[0].mxu0
        %v815 = vpop.f32.mrb[0].mxu0
        %v816 = vadd.f32 %v290, %v815
        %v817 = vpop.f32.mrb[0].mxu0
        %818 = vmatprep.mubr.bf16.mxu0 0
        %819 = vmatmul.mubr.bf16.gmra.mrb[0].mxu0 %v547
        %v820 = vpop.f32.mrb[0].mxu0
        %v821 = vadd.f32 %v290, %v820
        %v822 = vpop.f32.mrb[0].mxu0
        %v823 = vpop.f32.mrb[0].mxu0
        %v824 = vadd.f32 %v290, %v823
        %v825 = vpop.f32.mrb[0].mxu0
        %826 = vmatprep.mubr.bf16.mxu0 0
        %827 = vmatmul.mubr.bf16.gmra.mrb[0].mxu0 %v550
        %v828 = vpop.f32.mrb[0].mxu0
        %v829 = vadd.f32 %v290, %v828
        %v830 = vpop.f32.mrb[0].mxu0
        %v831 = vpop.f32.mrb[0].mxu0
        %v832 = vadd.f32 %v290, %v831
        %v833 = vpop.f32.mrb[0].mxu0
        %834 = vmatprep.mubr.bf16.mxu0 0
        %835 = vmatmul.mubr.bf16.gmra.mrb[0].mxu0 %v553
        %v836 = vpop.f32.mrb[0].mxu0
        %v837 = vadd.f32 %v290, %v836
        %v838 = vpop.f32.mrb[0].mxu0
        %v839 = vpop.f32.mrb[0].mxu0
        %v840 = vadd.f32 %v290, %v839
        %v841 = vpop.f32.mrb[0].mxu0
        %842 = vmatprep.mubr.bf16.mxu0 0
        %843 = vmatmul.mubr.bf16.gmra.mrb[0].mxu0 %v556
        %v844 = vpop.f32.mrb[0].mxu0
        %v845 = vadd.f32 %v290, %v844
        %v846 = vpop.f32.mrb[0].mxu0
        %v847 = vpop.f32.mrb[0].mxu0
        %v848 = vadd.f32 %v290, %v847
        %v849 = vpop.f32.mrb[0].mxu0
        %850 = vdwg.mxu0
        %v851 = vmax.f32 %v597, 0.0
        %v852 = vmax.f32 %v600, 0.0
        %v853 = vmax.f32 %v605, 0.0
        %v854 = vmax.f32 %v608, 0.0
        %v855 = vmax.f32 %v613, 0.0
        %v856 = vmax.f32 %v616, 0.0
        %v857 = vmax.f32 %v621, 0.0
        %v858 = vmax.f32 %v624, 0.0
        %v859 = vmax.f32 %v629, 0.0
        %v860 = vmax.f32 %v632, 0.0
        %v861 = vmax.f32 %v637, 0.0
        %v862 = vmax.f32 %v640, 0.0
        %v863 = vmax.f32 %v645, 0.0
        %v864 = vmax.f32 %v648, 0.0
        %v865 = vmax.f32 %v653, 0.0
        %v866 = vmax.f32 %v656, 0.0
        %v867 = vmax.f32 %v661, 0.0
        %v868 = vmax.f32 %v664, 0.0
        %v869 = vmax.f32 %v669, 0.0
        %v870 = vmax.f32 %v672, 0.0
        %v871 = vmax.f32 %v677, 0.0
        %v872 = vmax.f32 %v680, 0.0
        %v873 = vmax.f32 %v685, 0.0
        %v874 = vmax.f32 %v688, 0.0
        %v875 = vmax.f32 %v693, 0.0
        %v876 = vmax.f32 %v696, 0.0
        %v877 = vmax.f32 %v701, 0.0
        %v878 = vmax.f32 %v704, 0.0
        %v879 = vmax.f32 %v709, 0.0
        %v880 = vmax.f32 %v712, 0.0
        %v881 = vmax.f32 %v717, 0.0
        %v882 = vmax.f32 %v720, 0.0
        %v883 = vmax.f32 %v725, 0.0
        %v884 = vmax.f32 %v728, 0.0
        %v885 = vmax.f32 %v733, 0.0
        %v886 = vmax.f32 %v736, 0.0
        %v887 = vmax.f32 %v741, 0.0
        %v888 = vmax.f32 %v744, 0.0
        %v889 = vmax.f32 %v749, 0.0
        %v890 = vmax.f32 %v752, 0.0
        %v891 = vmax.f32 %v757, 0.0
        %v892 = vmax.f32 %v760, 0.0
        %v893 = vmax.f32 %v765, 0.0
        %v894 = vmax.f32 %v768, 0.0
        %v895 = vmax.f32 %v773, 0.0
        %v896 = vmax.f32 %v776, 0.0
        %v897 = vmax.f32 %v781, 0.0
        %v898 = vmax.f32 %v784, 0.0
        %v899 = vmax.f32 %v789, 0.0
        %v900 = vmax.f32 %v792, 0.0
        %v901 = vmax.f32 %v797, 0.0
        %v902 = vmax.f32 %v800, 0.0
        %v903 = vmax.f32 %v805, 0.0
        %v904 = vmax.f32 %v808, 0.0
        %v905 = vmax.f32 %v813, 0.0
        %v906 = vmax.f32 %v816, 0.0
        %v907 = vmax.f32 %v821, 0.0
        %v908 = vmax.f32 %v824, 0.0
        %v909 = vmax.f32 %v829, 0.0
        %v910 = vmax.f32 %v832, 0.0
        %v911 = vmax.f32 %v837, 0.0
        %v912 = vmax.f32 %v840, 0.0
        %v913 = vmax.f32 %v845, 0.0
        %v914 = vmax.f32 %v848, 0.0
        %v915 = vpack.c.bf16 %v852, %v851
        %v916 = vpack.c.bf16 %v854, %v853
        %v917 = vpack.c.bf16 %v856, %v855
        %v918 = vpack.c.bf16 %v858, %v857
        %v919 = vpack.c.bf16 %v860, %v859
        %v920 = vpack.c.bf16 %v862, %v861
        %v921 = vpack.c.bf16 %v864, %v863
        %v922 = vpack.c.bf16 %v866, %v865
        %v923 = vpack.c.bf16 %v868, %v867
        %v924 = vpack.c.bf16 %v870, %v869
        %v925 = vpack.c.bf16 %v872, %v871
        %v926 = vpack.c.bf16 %v874, %v873
        %v927 = vpack.c.bf16 %v876, %v875
        %v928 = vpack.c.bf16 %v878, %v877
        %v929 = vpack.c.bf16 %v880, %v879
        %v930 = vpack.c.bf16 %v882, %v881
        %v931 = vpack.c.bf16 %v884, %v883
        %v932 = vpack.c.bf16 %v886, %v885
        %v933 = vpack.c.bf16 %v888, %v887
        %v934 = vpack.c.bf16 %v890, %v889
        %v935 = vpack.c.bf16 %v892, %v891
        %v936 = vpack.c.bf16 %v894, %v893
        %v937 = vpack.c.bf16 %v896, %v895
        %v938 = vpack.c.bf16 %v898, %v897
        %v939 = vpack.c.bf16 %v900, %v899
        %v940 = vpack.c.bf16 %v902, %v901
        %v941 = vpack.c.bf16 %v904, %v903
        %v942 = vpack.c.bf16 %v906, %v905
        %v943 = vpack.c.bf16 %v908, %v907
        %v944 = vpack.c.bf16 %v910, %v909
        %v945 = vpack.c.bf16 %v912, %v911
        %v946 = vpack.c.bf16 %v914, %v913
        %v979 = vunpack.c.l.b16 %v915
        %v980 = vunpack.c.h.b16 %v915
        %v981 = vunpack.c.l.b16 %v916
        %v982 = vunpack.c.h.b16 %v916
        %v983 = vunpack.c.l.b16 %v917
        %v984 = vunpack.c.h.b16 %v917
        %v985 = vunpack.c.l.b16 %v918
        %v986 = vunpack.c.h.b16 %v918
        %v987 = vunpack.c.l.b16 %v919
        %v988 = vunpack.c.h.b16 %v919
        %v989 = vunpack.c.l.b16 %v920
        %v990 = vunpack.c.h.b16 %v920
        %v991 = vunpack.c.l.b16 %v921
        %v992 = vunpack.c.h.b16 %v921
        %v993 = vunpack.c.l.b16 %v922
        %v994 = vunpack.c.h.b16 %v922
        %v995 = vunpack.c.l.b16 %v923
        %v996 = vunpack.c.h.b16 %v923
        %v997 = vunpack.c.l.b16 %v924
        %v998 = vunpack.c.h.b16 %v924
        %v999 = vunpack.c.l.b16 %v925
        %v1000 = vunpack.c.h.b16 %v925
        %v1001 = vunpack.c.l.b16 %v926
        %v1002 = vunpack.c.h.b16 %v926
        %v1003 = vunpack.c.l.b16 %v927
        %v1004 = vunpack.c.h.b16 %v927
        %v1005 = vunpack.c.l.b16 %v928
        %v1006 = vunpack.c.h.b16 %v928
        %v1007 = vunpack.c.l.b16 %v929
        %v1008 = vunpack.c.h.b16 %v929
        %v1009 = vunpack.c.l.b16 %v930
        %v1010 = vunpack.c.h.b16 %v930
        %v1011 = vunpack.c.l.b16 %v931
        %v1012 = vunpack.c.h.b16 %v931
        %v1013 = vunpack.c.l.b16 %v932
        %v1014 = vunpack.c.h.b16 %v932
        %v1015 = vunpack.c.l.b16 %v933
        %v1016 = vunpack.c.h.b16 %v933
        %v1017 = vunpack.c.l.b16 %v934
        %v1018 = vunpack.c.h.b16 %v934
        %v1019 = vunpack.c.l.b16 %v935
        %v1020 = vunpack.c.h.b16 %v935
        %v1021 = vunpack.c.l.b16 %v936
        %v1022 = vunpack.c.h.b16 %v936
        %v1023 = vunpack.c.l.b16 %v937
        %v1024 = vunpack.c.h.b16 %v937
        %v1025 = vunpack.c.l.b16 %v938
        %v1026 = vunpack.c.h.b16 %v938
        %v1027 = vunpack.c.l.b16 %v939
        %v1028 = vunpack.c.h.b16 %v939
        %v1029 = vunpack.c.l.b16 %v940
        %v1030 = vunpack.c.h.b16 %v940
        %v1031 = vunpack.c.l.b16 %v941
        %v1032 = vunpack.c.h.b16 %v941
        %v1033 = vunpack.c.l.b16 %v942
        %v1034 = vunpack.c.h.b16 %v942
        %v1035 = vunpack.c.l.b16 %v943
        %v1036 = vunpack.c.h.b16 %v943
        %v1037 = vunpack.c.l.b16 %v944
        %v1038 = vunpack.c.h.b16 %v944
        %v1039 = vunpack.c.l.b16 %v945
        %v1040 = vunpack.c.h.b16 %v945
        %v1041 = vunpack.c.l.b16 %v946
        %v1042 = vunpack.c.h.b16 %v946
        %v1043 = vpack.c.b16 %v979, %v979
        %v1044 = vpack.c.b16 %v980, %v980
        %v1045 = vpack.c.b16 %v981, %v981
        %v1046 = vpack.c.b16 %v982, %v982
        %v1047 = vpack.c.b16 %v983, %v983
        %v1048 = vpack.c.b16 %v984, %v984
        %v1049 = vpack.c.b16 %v985, %v985
        %v1050 = vpack.c.b16 %v986, %v986
        %v1051 = vpack.c.b16 %v987, %v987
        %v1052 = vpack.c.b16 %v988, %v988
        %v1053 = vpack.c.b16 %v989, %v989
        %v1054 = vpack.c.b16 %v990, %v990
        %v1055 = vpack.c.b16 %v991, %v991
        %v1056 = vpack.c.b16 %v992, %v992
        %v1057 = vpack.c.b16 %v993, %v993
        %v1058 = vpack.c.b16 %v994, %v994
        %v1059 = vpack.c.b16 %v995, %v995
        %v1060 = vpack.c.b16 %v996, %v996
        %v1061 = vpack.c.b16 %v997, %v997
        %v1062 = vpack.c.b16 %v998, %v998
        %v1063 = vpack.c.b16 %v999, %v999
        %v1064 = vpack.c.b16 %v1000, %v1000
        %v1065 = vpack.c.b16 %v1001, %v1001
        %v1066 = vpack.c.b16 %v1002, %v1002
        %v1067 = vpack.c.b16 %v1003, %v1003
        %v1068 = vpack.c.b16 %v1004, %v1004
        %v1069 = vpack.c.b16 %v1005, %v1005
        %v1070 = vpack.c.b16 %v1006, %v1006
        %v1071 = vpack.c.b16 %v1007, %v1007
        %v1072 = vpack.c.b16 %v1008, %v1008
        %v1073 = vpack.c.b16 %v1009, %v1009
        %v1074 = vpack.c.b16 %v1010, %v1010
        %v1075 = vpack.c.b16 %v1011, %v1011
        %v1076 = vpack.c.b16 %v1012, %v1012
        %v1077 = vpack.c.b16 %v1013, %v1013
        %v1078 = vpack.c.b16 %v1014, %v1014
        %v1079 = vpack.c.b16 %v1015, %v1015
        %v1080 = vpack.c.b16 %v1016, %v1016
        %v1081 = vpack.c.b16 %v1017, %v1017
        %v1082 = vpack.c.b16 %v1018, %v1018
        %v1083 = vpack.c.b16 %v1019, %v1019
        %v1084 = vpack.c.b16 %v1020, %v1020
        %v1085 = vpack.c.b16 %v1021, %v1021
        %v1086 = vpack.c.b16 %v1022, %v1022
        %v1087 = vpack.c.b16 %v1023, %v1023
        %v1088 = vpack.c.b16 %v1024, %v1024
        %v1089 = vpack.c.b16 %v1025, %v1025
        %v1090 = vpack.c.b16 %v1026, %v1026
        %v1091 = vpack.c.b16 %v1027, %v1027
        %v1092 = vpack.c.b16 %v1028, %v1028
        %v1093 = vpack.c.b16 %v1029, %v1029
        %v1094 = vpack.c.b16 %v1030, %v1030
        %v1095 = vpack.c.b16 %v1031, %v1031
        %v1096 = vpack.c.b16 %v1032, %v1032
        %v1097 = vpack.c.b16 %v1033, %v1033
        %v1098 = vpack.c.b16 %v1034, %v1034
        %v1099 = vpack.c.b16 %v1035, %v1035
        %v1100 = vpack.c.b16 %v1036, %v1036
        %v1101 = vpack.c.b16 %v1037, %v1037
        %v1102 = vpack.c.b16 %v1038, %v1038
        %v1103 = vpack.c.b16 %v1039, %v1039
        %v1104 = vpack.c.b16 %v1040, %v1040
        %v1105 = vpack.c.b16 %v1041, %v1041
        %v1106 = vpack.c.b16 %v1042, %v1042
        %1171 = vst [vmem:[%s202] sm:$0xf] %v1043
        %1172 = vst [vmem:[%s202 + $0x4] sm:$0xf] %v1044
        %1173 = vst [vmem:[%s202 + $0x8] sm:$0xf] %v1045
        %1174 = vst [vmem:[%s202 + $0xc] sm:$0xf] %v1046
        %1175 = vst [vmem:[%s202 + $0x10] sm:$0xf] %v1047
        %1176 = vst [vmem:[%s202 + $0x14] sm:$0xf] %v1048
        %1177 = vst [vmem:[%s202 + $0x18] sm:$0xf] %v1049
        %1178 = vst [vmem:[%s202 + $0x1c] sm:$0xf] %v1050
        %1179 = vst [vmem:[%s202 + $0x20] sm:$0xf] %v1051
        %1180 = vst [vmem:[%s202 + $0x24] sm:$0xf] %v1052
        %1181 = vst [vmem:[%s202 + $0x28] sm:$0xf] %v1053
        %1182 = vst [vmem:[%s202 + $0x2c] sm:$0xf] %v1054
        %1183 = vst [vmem:[%s202 + $0x30] sm:$0xf] %v1055
        %1184 = vst [vmem:[%s202 + $0x34] sm:$0xf] %v1056
        %1185 = vst [vmem:[%s202 + $0x38] sm:$0xf] %v1057
        %1186 = vst [vmem:[%s202 + $0x3c] sm:$0xf] %v1058
        %1187 = vst [vmem:[%s202 + $0x40] sm:$0xf] %v1059
        %1188 = vst [vmem:[%s202 + $0x44] sm:$0xf] %v1060
        %1189 = vst [vmem:[%s202 + $0x48] sm:$0xf] %v1061
        %1190 = vst [vmem:[%s202 + $0x4c] sm:$0xf] %v1062
        %1191 = vst [vmem:[%s202 + $0x50] sm:$0xf] %v1063
        %1192 = vst [vmem:[%s202 + $0x54] sm:$0xf] %v1064
        %1193 = vst [vmem:[%s202 + $0x58] sm:$0xf] %v1065
        %1194 = vst [vmem:[%s202 + $0x5c] sm:$0xf] %v1066
        %1195 = vst [vmem:[%s202 + $0x60] sm:$0xf] %v1067
        %1196 = vst [vmem:[%s202 + $0x64] sm:$0xf] %v1068
        %1197 = vst [vmem:[%s202 + $0x68] sm:$0xf] %v1069
        %1198 = vst [vmem:[%s202 + $0x6c] sm:$0xf] %v1070
        %1199 = vst [vmem:[%s202 + $0x70] sm:$0xf] %v1071
        %1200 = vst [vmem:[%s202 + $0x74] sm:$0xf] %v1072
        %1201 = vst [vmem:[%s202 + $0x78] sm:$0xf] %v1073
        %1202 = vst [vmem:[%s202 + $0x7c] sm:$0xf] %v1074
        %1203 = vst [vmem:[%s202 + $0x80] sm:$0xf] %v1075
        %1204 = vst [vmem:[%s202 + $0x84] sm:$0xf] %v1076
        %1205 = vst [vmem:[%s202 + $0x88] sm:$0xf] %v1077
        %1206 = vst [vmem:[%s202 + $0x8c] sm:$0xf] %v1078
        %1207 = vst [vmem:[%s202 + $0x90] sm:$0xf] %v1079
        %1208 = vst [vmem:[%s202 + $0x94] sm:$0xf] %v1080
        %1209 = vst [vmem:[%s202 + $0x98] sm:$0xf] %v1081
        %1210 = vst [vmem:[%s202 + $0x9c] sm:$0xf] %v1082
        %1211 = vst [vmem:[%s202 + $0xa0] sm:$0xf] %v1083
        %1212 = vst [vmem:[%s202 + $0xa4] sm:$0xf] %v1084
        %1213 = vst [vmem:[%s202 + $0xa8] sm:$0xf] %v1085
        %1214 = vst [vmem:[%s202 + $0xac] sm:$0xf] %v1086
        %1215 = vst [vmem:[%s202 + $0xb0] sm:$0xf] %v1087
        %1216 = vst [vmem:[%s202 + $0xb4] sm:$0xf] %v1088
        %1217 = vst [vmem:[%s202 + $0xb8] sm:$0xf] %v1089
        %1218 = vst [vmem:[%s202 + $0xbc] sm:$0xf] %v1090
        %1219 = vst [vmem:[%s202 + $0xc0] sm:$0xf] %v1091
        %1220 = vst [vmem:[%s202 + $0xc4] sm:$0xf] %v1092
        %1221 = vst [vmem:[%s202 + $0xc8] sm:$0xf] %v1093
        %1222 = vst [vmem:[%s202 + $0xcc] sm:$0xf] %v1094
        %1223 = vst [vmem:[%s202 + $0xd0] sm:$0xf] %v1095
        %1224 = vst [vmem:[%s202 + $0xd4] sm:$0xf] %v1096
        %1225 = vst [vmem:[%s202 + $0xd8] sm:$0xf] %v1097
        %1226 = vst [vmem:[%s202 + $0xdc] sm:$0xf] %v1098
        %1227 = vst [vmem:[%s202 + $0xe0] sm:$0xf] %v1099
        %1228 = vst [vmem:[%s202 + $0xe4] sm:$0xf] %v1100
        %1229 = vst [vmem:[%s202 + $0xe8] sm:$0xf] %v1101
        %1230 = vst [vmem:[%s202 + $0xec] sm:$0xf] %v1102
        %1231 = vst [vmem:[%s202 + $0xf0] sm:$0xf] %v1103
        %1232 = vst [vmem:[%s202 + $0xf4] sm:$0xf] %v1104
        %1233 = vst [vmem:[%s202 + $0xf8] sm:$0xf] %v1105
        %1234 = vst [vmem:[%s202 + $0xfc] sm:$0xf] %v1106
        %s1235 = sand.u32 %s117, 1
        %s1236 = scalar_lea.sflag [#allocation3], %s1235
        %s1237 = sand.u32 %s117, 1
        %s1238 = smul.addr %s1237, 256
        %s1239 = scalar_lea.vmem [#allocation2], %s1238
        // Predicated region
        $region33: #{tpu_custom_call.1} parent=31 // pred_check
          %p1240 = pneg %p127
        $region34: #{tpu_custom_call.1} parent=31 // pred_check_branch
          %1242 = sbr.rel (%p1240) target = $region36
        $region35: #{tpu_custom_call.1} parent=31 // pred_region
          %s1243 = smul.u32 64, %s21
          %s1245 = ssub.s32 4096, 4096
          %1246 = vsyncadd %s1236, %s1245
          %s1247 = sadd.s32 %s22, %s1243
          %s1248 = smul.addr %s1247, 64
          %s1249 = scalar_lea.hbm %s3, %s1248
          %s1250 = sshll.u32 %s1239, 4
          %s1251 = int_to_ptr.vmem [resolvable:$true] %s1250
          %1256 = dma.vmem_to_hbm [thread:$0]  %s1251, 4096, %s1249, %s1236, 64, 64, 4
        $region36: #{tpu_custom_call.1} parent=31 // pred_fallthru
          _
      $region32: #{tpu_custom_call.1} parent=5 // pred_fallthru
        _
      %p1257 = scmp.le.s32.totalorder 2, %s12
      // Predicated region
      $region37: #{tpu_custom_call.1} parent=5 // pred_check
        %p1258 = pneg %p1257
      $region38: #{tpu_custom_call.1} parent=5 // pred_check_branch
        %1260 = sbr.rel (%p1258) target = $region40
      $region39: #{tpu_custom_call.1} parent=5 // pred_region
        %s1261 = ssub.s32 %s12, 2
        // Predicated region
        $region41: #{tpu_custom_call.1} parent=39 // pred_check
          %p1262 = pneg %p133
        $region42: #{tpu_custom_call.1} parent=39 // pred_check_branch
          %1264 = sbr.rel (%p1262) target = $region44
        $region43: #{tpu_custom_call.1} parent=39 // pred_region
          %s1265 = sand.u32 %s118, 1
          %s1266 = scalar_lea.sflag [#allocation3], %s1265
          %s1267 = sand.u32 %s118, 1
          %s1268 = smul.addr %s1267, 256
          %s1269 = scalar_lea.vmem [#allocation2], %s1268
          %1270 = dma.done %s1266, 4096
        $region44: #{tpu_custom_call.1} parent=39 // pred_fallthru
          _
      $region40: #{tpu_custom_call.1} parent=5 // pred_fallthru
        _
    $region6: #{tpu_custom_call.1} parent=1 // loop_footer
      %s16 = sadd.s32 1, %s12
    $region7: #{tpu_custom_call.1} parent=1 // loop_footer_branch
      %11 = sbr.rel target = $region3
    $region8: #{tpu_custom_call.1} parent=1 // loop_exit
      _
    %1271 = vsyncpa [#allocation3], 1
    %s1272 = scalar_lea.sflag [#allocation3], 1
    %1273 = vsyncpa %s1272, 1

</llo_original>
